<compile_context>
chip_gen: v6e
topology: v6e:2x2x1
jax: 0.10.0
libtpu: 0.0.40
codegen_flags: <defaults>
</compile_context>

<pallas_src>
import functools

import jax
import jax.numpy as jnp
from jax.experimental import pallas as pl
from jax.experimental.pallas import tpu as pltpu


def _rope_fold_kernel(pos_ref, selh_ref, wh_ref, expand_ref, cos_ref, sin_ref):
    """dim < 128: fold f = 256//dim rows onto lanes.

    cos/sin run on a (tR, 128) half-frequency block (half the EUP pushes of the
    duplicated layout); the duplicated (tR, 256) store layout is produced with a
    0/1 lane-selection matmul on the otherwise-idle MXU.
    """
    pos = pos_ref[...].astype(jnp.float32)                          # (tR, f)
    # Replicate each position across its Dh-wide half segment: exact for
    # integer position ids at HIGHEST precision.
    ph = jnp.dot(pos, selh_ref[...],
                 precision=jax.lax.Precision.HIGHEST,
                 preferred_element_type=jnp.float32)                # (tR, 128)
    fh = ph * wh_ref[...]                                           # (tR, 128)
    ch = jnp.cos(fh)
    sh = jnp.sin(fh)
    cos_ref[...] = jnp.dot(ch, expand_ref[...],
                           precision=jax.lax.Precision.HIGHEST,
                           preferred_element_type=jnp.float32
                           ).astype(cos_ref.dtype)                  # (tR, 256)
    sin_ref[...] = jnp.dot(sh, expand_ref[...],
                           precision=jax.lax.Precision.HIGHEST,
                           preferred_element_type=jnp.float32
                           ).astype(sin_ref.dtype)


def _rope_half_split_kernel(pos_ref, w_ref, cos_ref, sin_ref, *, half):
    """dim >= 256, Dh % 128 == 0: half-width EUP + two lane-aligned slice stores."""
    pos = pos_ref[...].astype(jnp.float32)                          # (tR, 1)
    fh = pos * w_ref[...]                                           # (tR, Dh)
    ch = jnp.cos(fh).astype(cos_ref.dtype)
    sh = jnp.sin(fh).astype(sin_ref.dtype)
    cos_ref[:, :half] = ch
    cos_ref[:, half:] = ch
    sin_ref[:, :half] = sh
    sin_ref[:, half:] = sh


def _rope_full_kernel(pos_ref, w_ref, cos_ref, sin_ref):
    """dim == 128 (and generic fallback): full-width freqs, no concat/copies."""
    pos = pos_ref[...].astype(jnp.float32)                          # (tR, 1)
    freqs = pos * w_ref[...]                                        # (tR, dim)
    cos_ref[...] = jnp.cos(freqs).astype(cos_ref.dtype)
    sin_ref[...] = jnp.sin(freqs).astype(sin_ref.dtype)


def linear_scaling_rotary_embedding(x, position_ids, *, dim,
                                    base=10000.0, scaling_factor=1.0,
                                    max_rows_per_tile=4096,
                                    vmem_budget_bytes=16 * 1024 * 1024,
                                    vmem_limit_bytes=24 * 1024 * 1024):
    """Returns (cos, sin), each of shape (batch, seq, dim), dtype = x.dtype."""
    B, S = position_ids.shape
    assert dim % 2 == 0, "rotary dim must be even"
    Dh = dim // 2
    out_dtype = x.dtype
    itemsize = jnp.dtype(out_dtype).itemsize

    # inv_freq (same formula as the PyTorch __init__) with the linear scaling
    # factor folded in on the host (bit-exact for power-of-two factors).
    inv_freq = 1.0 / (base ** (jnp.arange(0, dim, 2, dtype=jnp.float32) / dim))
    inv_scaled = (inv_freq * jnp.float32(1.0 / scaling_factor)).astype(jnp.float32)

    # --- path dispatch ----------------------------------------------------
    fold = (dim < 128) and (256 % dim == 0)
    half_split = (not fold) and (dim >= 256) and (Dh % 128 == 0)

    if fold:
        f = 256 // dim                 # rows folded onto the lane axis
        lastdim = f * dim              # 256 -> dense, unmasked stores
        halfw = f * Dh                 # 128 lanes of half-frequencies
        rows = pl.cdiv(S, f)
        pos_lane = f
    else:
        f = 1
        lastdim = dim
        rows = S
        pos_lane = 1

    # --- tile sizing -------------------------------------------------------
    # 2 outputs x 2 pipeline buffers (+ position input buffers) per row.
    bytes_per_row = 2 * 2 * lastdim * itemsize + 2 * pos_lane * 4
    cap = max(8, vmem_budget_bytes // max(bytes_per_row, 1))
    tR = min(rows, max_rows_per_tile, cap)
    # Keep >= 4 total grid programs when possible so v7x's two TensorCores
    # both get work under megacore sharding.
    desired_tiles = max(1, 4 // max(B, 1))
    if desired_tiles > 1:
        tR = min(tR, max(8, pl.cdiv(rows, desired_tiles)))
    if tR < rows:
        tR = max(8, (tR // 8) * 8)
    n_tiles = pl.cdiv(rows, tR)
    rows_pad = n_tiles * tR
    grid = (B, n_tiles)

    # --- host-side input prep (cheap pad + contiguous reshape) -------------
    s_total = rows_pad * f
    pos = position_ids
    if s_total != S:
        pos = jnp.pad(pos, ((0, 0), (0, s_total - S)))
    pos_in = pos.reshape(B, rows_pad, pos_lane)

    if fold:
        lane_h = jnp.arange(halfw)
        # 0/1 replication of each folded position across its Dh-wide segment.
        selh = (jnp.arange(f)[:, None] == (lane_h[None, :] // Dh)
                ).astype(jnp.float32)                               # (f, 128)
        wh = inv_scaled[lane_h % Dh][None, :]                       # (1, 128)
        # 0/1 expansion: half lane j -> duplicated output lane q.
        lane_o = jnp.arange(lastdim)
        src = (lane_o // dim) * Dh + (lane_o % dim) % Dh
        expand = (lane_h[:, None] == src[None, :]).astype(jnp.float32)  # (128, 256)
        kernel = _rope_fold_kernel
        extra_inputs = (selh, wh, expand)
        extra_specs = [pl.BlockSpec((f, halfw), lambda b, s: (0, 0)),
                       pl.BlockSpec((1, halfw), lambda b, s: (0, 0)),
                       pl.BlockSpec((halfw, lastdim), lambda b, s: (0, 0))]
        transcendentals = 2 * B * rows_pad * halfw
    elif half_split:
        w_half = inv_scaled[None, :]                                # (1, Dh)
        kernel = functools.partial(_rope_half_split_kernel, half=Dh)
        extra_inputs = (w_half,)
        extra_specs = [pl.BlockSpec((1, Dh), lambda b, s: (0, 0))]
        transcendentals = 2 * B * rows_pad * Dh
    else:
        w_full = jnp.concatenate([inv_scaled, inv_scaled])[None, :]  # (1, dim)
        kernel = _rope_full_kernel
        extra_inputs = (w_full,)
        extra_specs = [pl.BlockSpec((1, dim), lambda b, s: (0, 0))]
        transcendentals = 2 * B * rows_pad * dim

    pos_spec = pl.BlockSpec((pl.Squeezed(), tR, pos_lane), lambda b, s: (b, s, 0))
    out_spec = pl.BlockSpec((pl.Squeezed(), tR, lastdim), lambda b, s: (b, s, 0))

    cost = pl.CostEstimate(
        flops=int(4 * B * rows_pad * lastdim),
        transcendentals=int(transcendentals),
        bytes_accessed=int(2 * B * rows_pad * lastdim * itemsize + B * s_total * 4),
    )

    cos, sin = pl.pallas_call(
        kernel,
        out_shape=(jax.ShapeDtypeStruct((B, rows_pad, lastdim), out_dtype),
                   jax.ShapeDtypeStruct((B, rows_pad, lastdim), out_dtype)),
        grid_spec=pltpu.PrefetchScalarGridSpec(
            num_scalar_prefetch=0,
            grid=grid,
            in_specs=[pos_spec] + extra_specs,
            out_specs=[out_spec, out_spec],
        ),
        compiler_params=pltpu.CompilerParams(
            dimension_semantics=("parallel", "parallel"),
            vmem_limit_bytes=vmem_limit_bytes),
        cost_estimate=cost,
    )(pos_in, *extra_inputs)

    # Contiguous (free) reshape back to the module's output layout + unpad.
    cos = cos.reshape(B, rows_pad * f, dim)[:, :S, :]
    sin = sin.reshape(B, rows_pad * f, dim)[:, :S, :]
    return cos, sin


def _reference(x, position_ids, *, dim, base=10000.0, scaling_factor=1.0):
    inv_freq = 1.0 / (base ** (jnp.arange(0, dim, 2, dtype=jnp.float32) / dim))
    pos = position_ids.astype(jnp.float32) / scaling_factor
    freqs = pos[:, :, None] * inv_freq[None, None, :]
    emb = jnp.concatenate([freqs, freqs], axis=-1)
    return jnp.cos(emb).astype(x.dtype), jnp.sin(emb).astype(x.dtype)


def _check(batch, seq, dim, scaling_factor, key):
    k_x, k_pos = jax.random.split(key)
    x = jax.random.normal(k_x, (batch, seq, dim), dtype=jnp.float32)
    position_ids = jax.random.randint(k_pos, (batch, seq), 0, 2048,
                                      dtype=jnp.int32)

    cos, sin = linear_scaling_rotary_embedding(
        x, position_ids, dim=dim, base=10000.0, scaling_factor=scaling_factor)
    jax.block_until_ready((cos, sin))

    cos_ref, sin_ref = _reference(
        x, position_ids, dim=dim, base=10000.0, scaling_factor=scaling_factor)

    assert cos.shape == (batch, seq, dim) and sin.shape == (batch, seq, dim)
    assert cos.dtype == x.dtype and sin.dtype == x.dtype
    # Arguments reach O(1e3); tolerance covers residual cos/sin range-reduction
    # differences between the Mosaic and XLA lowerings (values bounded by 1).
    cerr = jnp.max(jnp.abs(cos - cos_ref))
    serr = jnp.max(jnp.abs(sin - sin_ref))
    assert jnp.allclose(cos, cos_ref, atol=1e-4, rtol=1e-4), f"cos err={cerr}"
    assert jnp.allclose(sin, sin_ref, atol=1e-4, rtol=1e-4), f"sin err={serr}"


if __name__ == "__main__":
    key = jax.random.PRNGKey(0)
    k1, k2, k3, k4 = jax.random.split(key, 4)

    # dim < 128 -> lane-folded path (half-width EUP + MXU expand, 256-lane stores).
    _check(batch=2, seq=8, dim=32, scaling_factor=2.0, key=k1)
    # dim >= 256 -> half-width EUP path with lane-aligned slice stores (no concat).
    _check(batch=2, seq=16, dim=256, scaling_factor=2.0, key=k2)
    # dim == 128 -> direct full-width path; also exercises B=1 multi-tile grid.
    _check(batch=1, seq=32, dim=128, scaling_factor=1.0, key=k3)
    # seq not a multiple of the fold factor -> host-side pad, still lane-dense.
    _check(batch=2, seq=11, dim=64, scaling_factor=2.0, key=k4)

    print("KERNEL_OK")
</pallas_src>

<mosaic_0001>
module attributes {stable_mosaic.version = 11 : i64} {
  func.func @_rope_fold_kernel(%arg0: i32, %arg1: i32, %arg2: memref<1x1x8xi32, #tpu.memory_space<vmem>>, %arg3: memref<8x128xf32, #tpu.memory_space<vmem>>, %arg4: memref<1x128xf32, #tpu.memory_space<vmem>>, %arg5: memref<128x256xf32, #tpu.memory_space<vmem>>, %arg6: memref<1x1x256xf32, #tpu.memory_space<vmem>>, %arg7: memref<1x1x256xf32, #tpu.memory_space<vmem>>) attributes {dimension_semantics = [#tpu.dimension_semantics<parallel>, #tpu.dimension_semantics<parallel>], iteration_bounds = array<i64: 2, 1>, scalar_prefetch = 0 : i64, scratch_operands = 0 : i64, tpu.core_type = #tpu.core_type<tc>, window_params = [{transform_indices = @transform_0, window_bounds = array<i64: 1, 1, 8>}, {pipeline_mode = #tpu.pipeline_mode<synchronous>, transform_indices = @transform_1, window_bounds = array<i64: 8, 128>}, {pipeline_mode = #tpu.pipeline_mode<synchronous>, transform_indices = @transform_2, window_bounds = array<i64: 1, 128>}, {pipeline_mode = #tpu.pipeline_mode<synchronous>, transform_indices = @transform_3, window_bounds = array<i64: 128, 256>}, {transform_indices = @transform_4, window_bounds = array<i64: 1, 1, 256>}, {transform_indices = @transform_5, window_bounds = array<i64: 1, 1, 256>}]} {
    %c0 = arith.constant 0 : index
    %c0_0 = arith.constant 0 : index
    %c0_1 = arith.constant 0 : index
    %0 = vector.load %arg2[%c0, %c0_0, %c0_1] : memref<1x1x8xi32, #tpu.memory_space<vmem>>, vector<1x1x8xi32>
    %1 = vector.shape_cast %0 : vector<1x1x8xi32> to vector<1x8xi32>
    %2 = arith.sitofp %1 : vector<1x8xi32> to vector<1x8xf32>
    %c0_2 = arith.constant 0 : index
    %c0_3 = arith.constant 0 : index
    %3 = vector.load %arg3[%c0_2, %c0_3] : memref<8x128xf32, #tpu.memory_space<vmem>>, vector<8x128xf32>
    %cst = arith.constant dense<0.000000e+00> : vector<1x128xf32>
    %4 = tpu.matmul %2, %3, %cst {dimension_numbers = #tpu.dot_dimension_numbers<[1], [0], [0], [1], [0, 0, 1, 1], [], []>, precision = #tpu.contract_precision<fp32>} : vector<1x8xf32>, vector<8x128xf32>, vector<1x128xf32> -> vector<1x128xf32>
    %c0_4 = arith.constant 0 : index
    %c0_5 = arith.constant 0 : index
    %5 = vector.load %arg4[%c0_4, %c0_5] : memref<1x128xf32, #tpu.memory_space<vmem>>, vector<1x128xf32>
    %6 = arith.mulf %4, %5 : vector<1x128xf32>
    %7 = math.cos %6 : vector<1x128xf32>
    %8 = math.sin %6 : vector<1x128xf32>
    %c0_6 = arith.constant 0 : index
    %c0_7 = arith.constant 0 : index
    %9 = vector.load %arg5[%c0_6, %c0_7] : memref<128x256xf32, #tpu.memory_space<vmem>>, vector<128x256xf32>
    %cst_8 = arith.constant dense<0.000000e+00> : vector<1x256xf32>
    %10 = tpu.matmul %7, %9, %cst_8 {dimension_numbers = #tpu.dot_dimension_numbers<[1], [0], [0], [1], [0, 0, 1, 1], [], []>, precision = #tpu.contract_precision<fp32>} : vector<1x128xf32>, vector<128x256xf32>, vector<1x256xf32> -> vector<1x256xf32>
    %c0_9 = arith.constant 0 : index
    %c0_10 = arith.constant 0 : index
    %c0_11 = arith.constant 0 : index
    %11 = vector.load %arg6[%c0_9, %c0_10, %c0_11] : memref<1x1x256xf32, #tpu.memory_space<vmem>>, vector<1x1x256xf32>
    %12 = vector.shape_cast %11 : vector<1x1x256xf32> to vector<1x256xf32>
    %13 = vector.shape_cast %10 : vector<1x256xf32> to vector<1x1x256xf32>
    tpu.vector_store %arg6[%c0_9, %c0_10, %c0_11], %13 {strides = array<i32>} : memref<1x1x256xf32, #tpu.memory_space<vmem>>, vector<1x1x256xf32>,
    %c0_12 = arith.constant 0 : index
    %c0_13 = arith.constant 0 : index
    %14 = vector.load %arg5[%c0_12, %c0_13] : memref<128x256xf32, #tpu.memory_space<vmem>>, vector<128x256xf32>
    %cst_14 = arith.constant dense<0.000000e+00> : vector<1x256xf32>
    %15 = tpu.matmul %8, %14, %cst_14 {dimension_numbers = #tpu.dot_dimension_numbers<[1], [0], [0], [1], [0, 0, 1, 1], [], []>, precision = #tpu.contract_precision<fp32>} : vector<1x128xf32>, vector<128x256xf32>, vector<1x256xf32> -> vector<1x256xf32>
    %c0_15 = arith.constant 0 : index
    %c0_16 = arith.constant 0 : index
    %c0_17 = arith.constant 0 : index
    %16 = vector.load %arg7[%c0_15, %c0_16, %c0_17] : memref<1x1x256xf32, #tpu.memory_space<vmem>>, vector<1x1x256xf32>
    %17 = vector.shape_cast %16 : vector<1x1x256xf32> to vector<1x256xf32>
    %18 = vector.shape_cast %15 : vector<1x256xf32> to vector<1x1x256xf32>
    tpu.vector_store %arg7[%c0_15, %c0_16, %c0_17], %18 {strides = array<i32>} : memref<1x1x256xf32, #tpu.memory_space<vmem>>, vector<1x1x256xf32>,
    return
  }
  func.func @transform_0(%arg0: i32, %arg1: i32) -> (i32, i32, i32) {
    %c0_i32 = arith.constant 0 : i32
    %c0_i32_0 = arith.constant 0 : i32
    return %arg0, %arg1, %c0_i32 : i32, i32, i32
  }
  func.func @transform_1(%arg0: i32, %arg1: i32) -> (i32, i32) {
    %c0_i32 = arith.constant 0 : i32
    %c0_i32_0 = arith.constant 0 : i32
    %c0_i32_1 = arith.constant 0 : i32
    return %c0_i32, %c0_i32_0 : i32, i32
  }
  func.func @transform_2(%arg0: i32, %arg1: i32) -> (i32, i32) {
    %c0_i32 = arith.constant 0 : i32
    %c0_i32_0 = arith.constant 0 : i32
    %c0_i32_1 = arith.constant 0 : i32
    return %c0_i32, %c0_i32_0 : i32, i32
  }
  func.func @transform_3(%arg0: i32, %arg1: i32) -> (i32, i32) {
    %c0_i32 = arith.constant 0 : i32
    %c0_i32_0 = arith.constant 0 : i32
    %c0_i32_1 = arith.constant 0 : i32
    return %c0_i32, %c0_i32_0 : i32, i32
  }
  func.func @transform_4(%arg0: i32, %arg1: i32) -> (i32, i32, i32) {
    %c0_i32 = arith.constant 0 : i32
    %c0_i32_0 = arith.constant 0 : i32
    return %arg0, %arg1, %c0_i32 : i32, i32, i32
  }
  func.func @transform_5(%arg0: i32, %arg1: i32) -> (i32, i32, i32) {
    %c0_i32 = arith.constant 0 : i32
    %c0_i32_0 = arith.constant 0 : i32
    return %arg0, %arg1, %c0_i32 : i32, i32, i32
  }
}

</mosaic_0001>

<llo_original>
// kernel: tpu_custom_call.1
$region0: #{tpu_custom_call.1}
  #allocation0 [shape = 'u32[]', space=smem, size = 0x4, offset = 0x4, fixed_abs, tag = 'smem constant byte address 0x4 - core index']
  #allocation1 [shape = 'u32[144,128]{1,0:T(1,128)}', space=vmem, size = 0x12000, scoped, tag = 'internal scratch']
  %s0 = inlined_call_operand.hbm [shape: s32[2,1,8], index: 0, kind: input, shape index: {}]
  %s1 = inlined_call_operand.hbm [shape: f32[8,128], index: 1, kind: input, shape index: {}]
  %s2 = inlined_call_operand.vmem [shape: f32[1,128], index: 2, kind: input, shape index: {}]
  %s3 = inlined_call_operand.hbm [shape: f32[128,256], index: 3, kind: input, shape index: {}]
  %s4 = inlined_call_operand.hbm [shape: f32[2,1,256], index: 4, kind: output, shape index: {0}]
  %s5 = inlined_call_operand.hbm [shape: f32[2,1,256], index: 5, kind: output, shape index: {1}]
  %6 = xla_tuple %s4, %s5
  %s7 = sld [smem:[#allocation0]]
  $region69: #{tpu_custom_call.1} parent=0
    _
  %s9 = ssub.s32 1, %s7
  %s10 = scalar_select 0, %s9, %s7
  $region1: #{tpu_custom_call.1} parent=0
    #allocation2 [shape = 'u8[1024]{0}', space=vmem, size = 0x400, scoped, tag = 'input window, operand 0']
    #allocation3 [shape = 's32[2]{0}', space=sflag, size = 0x8, scoped, tag = 'scoped memory for tpu_custom_call.1']
    #allocation4 [shape = 's32[2]{0}', space=sflag, size = 0x8, scoped, tag = 'scoped memory for tpu_custom_call.1']
    #allocation5 [shape = 'u8[4096]{0}', space=vmem, size = 0x1000, scoped, tag = 'input window, operand 1, single buffered']
    #allocation6 [shape = 's32[1]{0}', space=sflag, size = 0x4, scoped, tag = 'scoped memory for tpu_custom_call.1']
    #allocation7 [shape = 'u8[131072]{0}', space=vmem, size = 0x20000, scoped, tag = 'input window, operand 3, single buffered']
    #allocation8 [shape = 'u8[2048]{0}', space=vmem, size = 0x800, scoped, tag = 'output window, operand 0']
    #allocation9 [shape = 'u8[2048]{0}', space=vmem, size = 0x800, scoped, tag = 'output window, operand 1']
    #allocation10 [shape = 's32[2]{0}', space=sflag, size = 0x8, scoped, tag = 'scoped memory for tpu_custom_call.1']
    %11 = vsyncpa [#allocation3], 0
    %s12 = scalar_lea.sflag [#allocation3], 1
    %13 = vsyncpa %s12, 0
    %14 = vsyncpa [#allocation6], 0
    %15 = vsyncpa [#allocation4], 0
    %s16 = scalar_lea.sflag [#allocation4], 1
    %17 = vsyncpa %s16, 0
    %18 = vsyncpa [#allocation10], 0
    %s19 = scalar_lea.sflag [#allocation10], 1
    %20 = vsyncpa %s19, 0
    loop: start=0, step=1, limit=4
    $region2: #{tpu_custom_call.1} parent=1 // loop_pre_header
      _
    $region3: #{tpu_custom_call.1} parent=1 // loop_header
      %s22 = sphi 0, %s26
      %p23 = scmp.ge.s32.totalorder %s22, 4
      %s29 = sphi 0, %s41
      %s30 = sphi 0, %s37
      %s31 = sphi 0, %s29
      %s32 = sphi 0, %s30
      %s33 = sphi 0, %s31
      %s34 = sphi 0, %s32
      %s46 = sphi 0, %s48
      %s49 = sphi 0, %s46
      %s50 = sphi 0, %s49
      %s66 = sphi 0, %s50
      %s70 = sphi 0, %s70
      %s72 = sphi 0, %s70
      %s73 = sphi 0, %s72
      %s87 = sphi 0, %s73
      %s91 = sphi 0, %s91
      %s93 = sphi 0, %s91
      %s94 = sphi 0, %s93
      %s108 = sphi 0, %s94
      %s112 = sphi 0, %s112
      %s114 = sphi 0, %s112
      %s115 = sphi 0, %s114
      %s129 = sphi 0, %s115
      %s137 = sphi 0, %s139
      %s140 = sphi 0, %s137
      %s141 = sphi 0, %s140
      %s157 = sphi 0, %s141
      %s165 = sphi 0, %s167
      %s168 = sphi 0, %s165
      %s169 = sphi 0, %s168
      %s185 = sphi 0, %s169
    $region4: #{tpu_custom_call.1} parent=1 // loop_header_branch
      %25 = sbr.rel (%p23) target = $region8
    $region5: #{tpu_custom_call.1} parent=1 // loop_body
      %s27 = ssub.s32 %s22, 1
      %s28 = ssub.s32 %s22, 2
      %s35 = sadd.s32 1, %s30
      %p36 = scmp.ge.s32.totalorder %s35, 1
      %s37 = scalar_select %p36, 0, %s35
      %s38 = sadd.s32 1, %s29
      %s39 = scalar_select %p36, %s38, %s29
      %p40 = scmp.ge.s32.totalorder %s39, 2
      %s41 = scalar_select %p40, 0, %s39
      %s42 = ssub.s32 %s29, %s41
      %s43 = ssub.s32 %s30, %s37
      %s44 = sor.u32 %s42, %s43
      %p45 = scmp.eq.s32.totalorder %s44, 0
      %s47 = sadd.s32 %s46, 1
      %s48 = scalar_select %p45, %s46, %s47
      %p51 = pneg %p45
      %p52 = scmp.eq.s32.totalorder %s22, 1
      %p53 = por %p51, %p52
      %p54 = scmp.ne.s32.totalorder %s46, %s49
      %p55 = scmp.eq.s32.totalorder %s22, 0
      %p56 = por %p54, %p55
      %p57 = scmp.ne.s32.totalorder %s46, %s49
      %p58 = scmp.eq.s32.totalorder %s27, 1
      %p59 = por %p57, %p58
      %p60 = scmp.ne.s32.totalorder %s49, %s50
      %p61 = scmp.eq.s32.totalorder %s27, 0
      %p62 = por %p60, %p61
      %p63 = scmp.ne.s32.totalorder %s49, %s50
      %p64 = scmp.eq.s32.totalorder %s28, 1
      %p65 = por %p63, %p64
      %p67 = scmp.ne.s32.totalorder %s50, %s66
      %p68 = scmp.eq.s32.totalorder %s28, 0
      %p69 = por %p67, %p68
      %s71 = sadd.s32 %s70, 1
      %p74 = scmp.eq.s32.totalorder %s22, 1
      %p75 = scmp.ne.s32.totalorder %s70, %s72
      %p76 = scmp.eq.s32.totalorder %s22, 0
      %p77 = por %p75, %p76
      %p78 = scmp.ne.s32.totalorder %s70, %s72
      %p79 = scmp.eq.s32.totalorder %s27, 1
      %p80 = por %p78, %p79
      %p81 = scmp.ne.s32.totalorder %s72, %s73
      %p82 = scmp.eq.s32.totalorder %s27, 0
      %p83 = por %p81, %p82
      %p84 = scmp.ne.s32.totalorder %s72, %s73
      %p85 = scmp.eq.s32.totalorder %s28, 1
      %p86 = por %p84, %p85
      %p88 = scmp.ne.s32.totalorder %s73, %s87
      %p89 = scmp.eq.s32.totalorder %s28, 0
      %p90 = por %p88, %p89
      %s92 = sadd.s32 %s91, 1
      %p95 = scmp.eq.s32.totalorder %s22, 1
      %p96 = scmp.ne.s32.totalorder %s91, %s93
      %p97 = scmp.eq.s32.totalorder %s22, 0
      %p98 = por %p96, %p97
      %p99 = scmp.ne.s32.totalorder %s91, %s93
      %p100 = scmp.eq.s32.totalorder %s27, 1
      %p101 = por %p99, %p100
      %p102 = scmp.ne.s32.totalorder %s93, %s94
      %p103 = scmp.eq.s32.totalorder %s27, 0
      %p104 = por %p102, %p103
      %p105 = scmp.ne.s32.totalorder %s93, %s94
      %p106 = scmp.eq.s32.totalorder %s28, 1
      %p107 = por %p105, %p106
      %p109 = scmp.ne.s32.totalorder %s94, %s108
      %p110 = scmp.eq.s32.totalorder %s28, 0
      %p111 = por %p109, %p110
      %s113 = sadd.s32 %s112, 1
      %p116 = scmp.eq.s32.totalorder %s22, 1
      %p117 = scmp.ne.s32.totalorder %s112, %s114
      %p118 = scmp.eq.s32.totalorder %s22, 0
      %p119 = por %p117, %p118
      %p120 = scmp.ne.s32.totalorder %s112, %s114
      %p121 = scmp.eq.s32.totalorder %s27, 1
      %p122 = por %p120, %p121
      %p123 = scmp.ne.s32.totalorder %s114, %s115
      %p124 = scmp.eq.s32.totalorder %s27, 0
      %p125 = por %p123, %p124
      %p126 = scmp.ne.s32.totalorder %s114, %s115
      %p127 = scmp.eq.s32.totalorder %s28, 1
      %p128 = por %p126, %p127
      %p130 = scmp.ne.s32.totalorder %s115, %s129
      %p131 = scmp.eq.s32.totalorder %s28, 0
      %p132 = por %p130, %p131
      %s133 = ssub.s32 %s29, %s41
      %s134 = ssub.s32 %s30, %s37
      %s135 = sor.u32 %s133, %s134
      %p136 = scmp.eq.s32.totalorder %s135, 0
      %s138 = sadd.s32 %s137, 1
      %s139 = scalar_select %p136, %s137, %s138
      %p142 = pneg %p136
      %p143 = scmp.eq.s32.totalorder %s22, 1
      %p144 = por %p142, %p143
      %p145 = scmp.ne.s32.totalorder %s137, %s140
      %p146 = scmp.eq.s32.totalorder %s22, 0
      %p147 = por %p145, %p146
      %p148 = scmp.ne.s32.totalorder %s137, %s140
      %p149 = scmp.eq.s32.totalorder %s27, 1
      %p150 = por %p148, %p149
      %p151 = scmp.ne.s32.totalorder %s140, %s141
      %p152 = scmp.eq.s32.totalorder %s27, 0
      %p153 = por %p151, %p152
      %p154 = scmp.ne.s32.totalorder %s140, %s141
      %p155 = scmp.eq.s32.totalorder %s28, 1
      %p156 = por %p154, %p155
      %p158 = scmp.ne.s32.totalorder %s141, %s157
      %p159 = scmp.eq.s32.totalorder %s28, 0
      %p160 = por %p158, %p159
      %s161 = ssub.s32 %s29, %s41
      %s162 = ssub.s32 %s30, %s37
      %s163 = sor.u32 %s161, %s162
      %p164 = scmp.eq.s32.totalorder %s163, 0
      %s166 = sadd.s32 %s165, 1
      %s167 = scalar_select %p164, %s165, %s166
      %p170 = pneg %p164
      %p171 = scmp.eq.s32.totalorder %s22, 1
      %p172 = por %p170, %p171
      %p173 = scmp.ne.s32.totalorder %s165, %s168
      %p174 = scmp.eq.s32.totalorder %s22, 0
      %p175 = por %p173, %p174
      %p176 = scmp.ne.s32.totalorder %s165, %s168
      %p177 = scmp.eq.s32.totalorder %s27, 1
      %p178 = por %p176, %p177
      %p179 = scmp.ne.s32.totalorder %s168, %s169
      %p180 = scmp.eq.s32.totalorder %s27, 0
      %p181 = por %p179, %p180
      %p182 = scmp.ne.s32.totalorder %s168, %s169
      %p183 = scmp.eq.s32.totalorder %s28, 1
      %p184 = por %p182, %p183
      %p186 = scmp.ne.s32.totalorder %s169, %s185
      %p187 = scmp.eq.s32.totalorder %s28, 0
      %p188 = por %p186, %p187
      %p189 = scmp.le.s32.totalorder 1, %s22
      %p190 = scmp.lt.s32.totalorder %s22, 3
      %p191 = pnand %p189, %p190
      %p192 = pneg %p191
      // Predicated region
      $region9: #{tpu_custom_call.1} parent=5 // pred_check
        _
      $region10: #{tpu_custom_call.1} parent=5 // pred_check_branch
        %194 = sbr.rel (%p191) target = $region12
      $region11: #{tpu_custom_call.1} parent=5 // pred_region
        %s195 = ssub.s32 %s22, 1
        // Predicated region
        $region13: #{tpu_custom_call.1} parent=11 // pred_check
          %p196 = pneg %p83
        $region14: #{tpu_custom_call.1} parent=11 // pred_check_branch
          %198 = sbr.rel (%p196) target = $region16
        $region15: #{tpu_custom_call.1} parent=11 // pred_region
          %s200 = ssub.s32 128, 128
          %201 = vsyncadd [#allocation6], %s200
          %s203 = sshll.u32 [#allocation5], 4
          %s204 = int_to_ptr.vmem [resolvable:$true] %s203
          %206 = dma.hbm_to_vmem [thread:$0]  %s1, 128, %s204, [#allocation6]
        $region16: #{tpu_custom_call.1} parent=11 // pred_fallthru
          _
        // Predicated region
        $region17: #{tpu_custom_call.1} parent=11 // pred_check
          %p207 = pneg %p104
        $region18: #{tpu_custom_call.1} parent=11 // pred_check_branch
          %209 = sbr.rel (%p207) target = $region20
        $region19: #{tpu_custom_call.1} parent=11 // pred_region
          _
        $region20: #{tpu_custom_call.1} parent=11 // pred_fallthru
          _
        // Predicated region
        $region21: #{tpu_custom_call.1} parent=11 // pred_check
          %p210 = pneg %p125
        $region22: #{tpu_custom_call.1} parent=11 // pred_check_branch
          %212 = sbr.rel (%p210) target = $region24
        $region23: #{tpu_custom_call.1} parent=11 // pred_region
          %s214 = ssub.s32 4096, 4096
          %215 = vsyncadd [#allocation6], %s214
          %s216 = sshll.u32 [#allocation7], 4
          %s217 = int_to_ptr.vmem [resolvable:$true] %s216
          %222 = dma.hbm_to_vmem [thread:$0]  %s3, 4096, %s217, [#allocation6], 256, 256, 16
        $region24: #{tpu_custom_call.1} parent=11 // pred_fallthru
          _
      $region12: #{tpu_custom_call.1} parent=5 // pred_fallthru
        _
      %p223 = scmp.lt.s32.totalorder %s22, 2
      // Predicated region
      $region25: #{tpu_custom_call.1} parent=5 // pred_check
        %p224 = pneg %p223
      $region26: #{tpu_custom_call.1} parent=5 // pred_check_branch
        %226 = sbr.rel (%p224) target = $region28
      $region27: #{tpu_custom_call.1} parent=5 // pred_region
        // Predicated region
        $region29: #{tpu_custom_call.1} parent=27 // pred_check
          %p227 = pneg %p56
        $region30: #{tpu_custom_call.1} parent=27 // pred_check_branch
          %229 = sbr.rel (%p227) target = $region32
        $region31: #{tpu_custom_call.1} parent=27 // pred_region
          %s230 = sand.u32 %s46, 1
          %s231 = scalar_lea.sflag [#allocation3], %s230
          %s232 = sand.u32 %s46, 1
          %s233 = scalar_lea.vmem [#allocation2], %s232
          %s235 = ssub.s32 16, 16
          %236 = vsyncadd %s231, %s235
          %s237 = sadd.s32 %s30, %s29
          %s238 = smul.addr %s237, 16
          %s239 = scalar_lea.hbm %s0, %s238
          %s241 = sshll.u32 %s233, 4
          %s242 = int_to_ptr.vmem [resolvable:$true] %s241
          %244 = dma.hbm_to_vmem [thread:$0]  %s239, 16, %s242, %s231
        $region32: #{tpu_custom_call.1} parent=27 // pred_fallthru
          _
      $region28: #{tpu_custom_call.1} parent=5 // pred_fallthru
        _
      %p245 = scmp.le.s32.totalorder 1, %s22
      %p246 = scmp.lt.s32.totalorder %s22, 3
      %p247 = pnand %p245, %p246
      %p248 = pneg %p247
      // Predicated region
      $region33: #{tpu_custom_call.1} parent=5 // pred_check
        _
      $region34: #{tpu_custom_call.1} parent=5 // pred_check_branch
        %250 = sbr.rel (%p247) target = $region36
      $region35: #{tpu_custom_call.1} parent=5 // pred_region
        %s251 = ssub.s32 %s22, 1
        %s252 = sand.u32 %s49, 1
        %s253 = scalar_lea.sflag [#allocation3], %s252
        %s254 = sand.u32 %s49, 1
        %s255 = scalar_lea.vmem [#allocation2], %s254
        // Predicated region
        $region37: #{tpu_custom_call.1} parent=35 // pred_check
          %p256 = pneg %p62
        $region38: #{tpu_custom_call.1} parent=35 // pred_check_branch
          %258 = sbr.rel (%p256) target = $region40
        $region39: #{tpu_custom_call.1} parent=35 // pred_region
          %259 = dma.done %s253, 16
        $region40: #{tpu_custom_call.1} parent=35 // pred_fallthru
          _
        // Predicated region
        $region41: #{tpu_custom_call.1} parent=35 // pred_check
          %p260 = pneg %p83
        $region42: #{tpu_custom_call.1} parent=35 // pred_check_branch
          %262 = sbr.rel (%p260) target = $region44
        $region43: #{tpu_custom_call.1} parent=35 // pred_region
          %263 = dma.done [#allocation6], 128
        $region44: #{tpu_custom_call.1} parent=35 // pred_fallthru
          _
        // Predicated region
        $region45: #{tpu_custom_call.1} parent=35 // pred_check
          %p264 = pneg %p125
        $region46: #{tpu_custom_call.1} parent=35 // pred_check_branch
          %266 = sbr.rel (%p264) target = $region48
        $region47: #{tpu_custom_call.1} parent=35 // pred_region
          %267 = dma.done [#allocation6], 4096
        $region48: #{tpu_custom_call.1} parent=35 // pred_fallthru
          _
        %s268 = sand.u32 %s49, 1
        %s269 = scalar_lea.sflag [#allocation3], %s268
        %s270 = sand.u32 %s49, 1
        %s271 = scalar_lea.vmem [#allocation2], %s270
        %p272 = pneg %p62
        %p273 = pneg %p59
        %p274 = pneg %p83
        %p275 = pneg %p80
        %p276 = pneg %p104
        %p277 = pneg %p101
        %p278 = pneg %p125
        %p279 = pneg %p122
        %p280 = pneg %p153
        %p281 = pneg %p150
        %s282 = sand.u32 %s140, 1
        %s283 = scalar_lea.sflag [#allocation4], %s282
        %s284 = sand.u32 %s140, 1
        %s285 = smul.addr %s284, 2
        %s286 = scalar_lea.vmem [#allocation8], %s285
        %p287 = pneg %p181
        %p288 = pneg %p178
        %s289 = sand.u32 %s168, 1
        %s290 = scalar_lea.sflag [#allocation10], %s289
        %s291 = sand.u32 %s168, 1
        %s292 = smul.addr %s291, 2
        %s293 = scalar_lea.vmem [#allocation9], %s292
        %v294 = vld [vmem:[%s255] sm:$0x1]
        %v295 = vcvt.s32.f32 %v294
        %v296 = vld [vmem:[#allocation5] sm:$0xff]
        %vm297 = vcmask 64512
        %v299 = vsel %vm297, %v295, 0
        %301 = vmatprep.subr.mxu0 0.0
        %302 = vmatpush1.msra.mxu0 0.0
        %303 = vmatprep.subr.mxu0 0.0
        %304 = vmatpush1.msra.mxu0 0.0
        %305 = vmatprep.subr.mxu0 0.0
        %306 = vmatpush1.msra.mxu0 0.0
        %307 = vmatprep.subr.mxu0 0.0
        %308 = vmatpush1.msra.mxu0 0.0
        %309 = vmatprep.subr.mxu0 0.0
        %310 = vmatpush1.msra.mxu0 0.0
        %311 = vmatprep.subr.mxu0 0.0
        %312 = vmatpush1.msra.mxu0 0.0
        %313 = vmatprep.subr.mxu0 0.0
        %314 = vmatpush1.msra.mxu0 0.0
        %315 = vmatprep.subr.mxu0 0.0
        %316 = vmatpush1.msra.mxu0 0.0
        %317 = vmatprep.subr.mxu0 0.0
        %318 = vmatpush1.msra.mxu0 0.0
        %319 = vmatprep.subr.mxu0 0.0
        %320 = vmatpush1.msra.mxu0 0.0
        %321 = vmatprep.subr.mxu0 0.0
        %322 = vmatpush1.msra.mxu0 0.0
        %323 = vmatprep.subr.mxu0 0.0
        %324 = vmatpush1.msra.mxu0 0.0
        %325 = vmatprep.subr.mxu0 0.0
        %326 = vmatpush1.msra.mxu0 0.0
        %327 = vmatprep.subr.mxu0 0.0
        %328 = vmatpush1.msra.mxu0 0.0
        %329 = vmatprep.subr.mxu0 0.0
        %330 = vmatpush1.msra.mxu0 0.0
        %331 = vmatprep.subr.mxu0 0.0
        %v332 = vand.u32 %v296, 4294901760
        %333 = vmatpush1.msra.mxu0 %v332
        %334 = vmatprep.subr.mxu0 0.0
        %335 = vmatpush2.msra.mxu0 0.0
        %336 = vmatprep.subr.mxu0 0.0
        %337 = vmatpush2.msra.mxu0 0.0
        %338 = vmatprep.subr.mxu0 0.0
        %339 = vmatpush2.msra.mxu0 0.0
        %340 = vmatprep.subr.mxu0 0.0
        %341 = vmatpush2.msra.mxu0 0.0
        %342 = vmatprep.subr.mxu0 0.0
        %343 = vmatpush2.msra.mxu0 0.0
        %344 = vmatprep.subr.mxu0 0.0
        %345 = vmatpush2.msra.mxu0 0.0
        %346 = vmatprep.subr.mxu0 0.0
        %347 = vmatpush2.msra.mxu0 0.0
        %348 = vmatprep.subr.mxu0 0.0
        %349 = vmatpush2.msra.mxu0 0.0
        %350 = vmatprep.subr.mxu0 0.0
        %351 = vmatpush2.msra.mxu0 0.0
        %352 = vmatprep.subr.mxu0 0.0
        %353 = vmatpush2.msra.mxu0 0.0
        %354 = vmatprep.subr.mxu0 0.0
        %355 = vmatpush2.msra.mxu0 0.0
        %356 = vmatprep.subr.mxu0 0.0
        %357 = vmatpush2.msra.mxu0 0.0
        %358 = vmatprep.subr.mxu0 0.0
        %359 = vmatpush2.msra.mxu0 0.0
        %360 = vmatprep.subr.mxu0 0.0
        %361 = vmatpush2.msra.mxu0 0.0
        %362 = vmatprep.subr.mxu0 0.0
        %363 = vmatpush2.msra.mxu0 0.0
        %364 = vmatprep.subr.mxu0 0.0
        %365 = vmatpush2.msra.mxu0 0.0
        %366 = vmatprep.mubr.f32.mxu0 0.0
        %v367 = vand.u32 %v299, 4294901760
        %v368 = vsub.f32 %v299, %v367
        %v369 = vand.u32 %v368, 4294901760
        %v370 = vsub.f32 %v368, %v369
        %v371 = vand.u32 %v370, 4294901760
        %372 = vmatmul.mubr.f32.gmra.mxu0 %v371
        %v373 = vpop.f32.mrf.mxu0
        %v374 = vadd.f32 0.0, %v373
        %v375 = vpop.f32.mrf.mxu0
        %376 = vdwg.mxu0
        %377 = vmatprep.subr.mxu0 0.0
        %378 = vmatpush1.msra.mxu0 0.0
        %379 = vmatprep.subr.mxu0 0.0
        %380 = vmatpush1.msra.mxu0 0.0
        %381 = vmatprep.subr.mxu0 0.0
        %382 = vmatpush1.msra.mxu0 0.0
        %383 = vmatprep.subr.mxu0 0.0
        %384 = vmatpush1.msra.mxu0 0.0
        %385 = vmatprep.subr.mxu0 0.0
        %386 = vmatpush1.msra.mxu0 0.0
        %387 = vmatprep.subr.mxu0 0.0
        %388 = vmatpush1.msra.mxu0 0.0
        %389 = vmatprep.subr.mxu0 0.0
        %390 = vmatpush1.msra.mxu0 0.0
        %391 = vmatprep.subr.mxu0 0.0
        %392 = vmatpush1.msra.mxu0 0.0
        %393 = vmatprep.subr.mxu0 0.0
        %394 = vmatpush1.msra.mxu0 0.0
        %395 = vmatprep.subr.mxu0 0.0
        %396 = vmatpush1.msra.mxu0 0.0
        %397 = vmatprep.subr.mxu0 0.0
        %398 = vmatpush1.msra.mxu0 0.0
        %399 = vmatprep.subr.mxu0 0.0
        %400 = vmatpush1.msra.mxu0 0.0
        %401 = vmatprep.subr.mxu0 0.0
        %402 = vmatpush1.msra.mxu0 0.0
        %403 = vmatprep.subr.mxu0 0.0
        %404 = vmatpush1.msra.mxu0 0.0
        %405 = vmatprep.subr.mxu0 0.0
        %406 = vmatpush1.msra.mxu0 0.0
        %407 = vmatprep.subr.mxu0 0.0
        %v408 = vand.u32 %v296, 4294901760
        %v409 = vsub.f32 %v296, %v408
        %v410 = vand.u32 %v409, 4294901760
        %v411 = vsub.f32 %v409, %v410
        %v412 = vand.u32 %v411, 4294901760
        %413 = vmatpush1.msra.mxu0 %v412
        %414 = vmatprep.subr.mxu0 0.0
        %415 = vmatpush2.msra.mxu0 0.0
        %416 = vmatprep.subr.mxu0 0.0
        %417 = vmatpush2.msra.mxu0 0.0
        %418 = vmatprep.subr.mxu0 0.0
        %419 = vmatpush2.msra.mxu0 0.0
        %420 = vmatprep.subr.mxu0 0.0
        %421 = vmatpush2.msra.mxu0 0.0
        %422 = vmatprep.subr.mxu0 0.0
        %423 = vmatpush2.msra.mxu0 0.0
        %424 = vmatprep.subr.mxu0 0.0
        %425 = vmatpush2.msra.mxu0 0.0
        %426 = vmatprep.subr.mxu0 0.0
        %427 = vmatpush2.msra.mxu0 0.0
        %428 = vmatprep.subr.mxu0 0.0
        %429 = vmatpush2.msra.mxu0 0.0
        %430 = vmatprep.subr.mxu0 0.0
        %431 = vmatpush2.msra.mxu0 0.0
        %432 = vmatprep.subr.mxu0 0.0
        %433 = vmatpush2.msra.mxu0 0.0
        %434 = vmatprep.subr.mxu0 0.0
        %435 = vmatpush2.msra.mxu0 0.0
        %436 = vmatprep.subr.mxu0 0.0
        %437 = vmatpush2.msra.mxu0 0.0
        %438 = vmatprep.subr.mxu0 0.0
        %439 = vmatpush2.msra.mxu0 0.0
        %440 = vmatprep.subr.mxu0 0.0
        %441 = vmatpush2.msra.mxu0 0.0
        %442 = vmatprep.subr.mxu0 0.0
        %443 = vmatpush2.msra.mxu0 0.0
        %444 = vmatprep.subr.mxu0 0.0
        %445 = vmatpush2.msra.mxu0 0.0
        %446 = vmatprep.mubr.f32.mxu0 0.0
        %v447 = vand.u32 %v299, 4294901760
        %448 = vmatmul.mubr.f32.gmra.mxu0 %v447
        %v449 = vpop.f32.mrf.mxu0
        %v450 = vadd.f32 %v374, %v449
        %v451 = vpop.f32.mrf.mxu0
        %452 = vdwg.mxu0
        %453 = vmatprep.subr.mxu0 0.0
        %454 = vmatpush1.msra.mxu0 0.0
        %455 = vmatprep.subr.mxu0 0.0
        %456 = vmatpush1.msra.mxu0 0.0
        %457 = vmatprep.subr.mxu0 0.0
        %458 = vmatpush1.msra.mxu0 0.0
        %459 = vmatprep.subr.mxu0 0.0
        %460 = vmatpush1.msra.mxu0 0.0
        %461 = vmatprep.subr.mxu0 0.0
        %462 = vmatpush1.msra.mxu0 0.0
        %463 = vmatprep.subr.mxu0 0.0
        %464 = vmatpush1.msra.mxu0 0.0
        %465 = vmatprep.subr.mxu0 0.0
        %466 = vmatpush1.msra.mxu0 0.0
        %467 = vmatprep.subr.mxu0 0.0
        %468 = vmatpush1.msra.mxu0 0.0
        %469 = vmatprep.subr.mxu0 0.0
        %470 = vmatpush1.msra.mxu0 0.0
        %471 = vmatprep.subr.mxu0 0.0
        %472 = vmatpush1.msra.mxu0 0.0
        %473 = vmatprep.subr.mxu0 0.0
        %474 = vmatpush1.msra.mxu0 0.0
        %475 = vmatprep.subr.mxu0 0.0
        %476 = vmatpush1.msra.mxu0 0.0
        %477 = vmatprep.subr.mxu0 0.0
        %478 = vmatpush1.msra.mxu0 0.0
        %479 = vmatprep.subr.mxu0 0.0
        %480 = vmatpush1.msra.mxu0 0.0
        %481 = vmatprep.subr.mxu0 0.0
        %482 = vmatpush1.msra.mxu0 0.0
        %483 = vmatprep.subr.mxu0 0.0
        %v484 = vand.u32 %v296, 4294901760
        %v485 = vsub.f32 %v296, %v484
        %486 = vmatpush1.msra.mxu0 %v485
        %487 = vmatprep.subr.mxu0 0.0
        %488 = vmatpush2.msra.mxu0 0.0
        %489 = vmatprep.subr.mxu0 0.0
        %490 = vmatpush2.msra.mxu0 0.0
        %491 = vmatprep.subr.mxu0 0.0
        %492 = vmatpush2.msra.mxu0 0.0
        %493 = vmatprep.subr.mxu0 0.0
        %494 = vmatpush2.msra.mxu0 0.0
        %495 = vmatprep.subr.mxu0 0.0
        %496 = vmatpush2.msra.mxu0 0.0
        %497 = vmatprep.subr.mxu0 0.0
        %498 = vmatpush2.msra.mxu0 0.0
        %499 = vmatprep.subr.mxu0 0.0
        %500 = vmatpush2.msra.mxu0 0.0
        %501 = vmatprep.subr.mxu0 0.0
        %502 = vmatpush2.msra.mxu0 0.0
        %503 = vmatprep.subr.mxu0 0.0
        %504 = vmatpush2.msra.mxu0 0.0
        %505 = vmatprep.subr.mxu0 0.0
        %506 = vmatpush2.msra.mxu0 0.0
        %507 = vmatprep.subr.mxu0 0.0
        %508 = vmatpush2.msra.mxu0 0.0
        %509 = vmatprep.subr.mxu0 0.0
        %510 = vmatpush2.msra.mxu0 0.0
        %511 = vmatprep.subr.mxu0 0.0
        %512 = vmatpush2.msra.mxu0 0.0
        %513 = vmatprep.subr.mxu0 0.0
        %514 = vmatpush2.msra.mxu0 0.0
        %515 = vmatprep.subr.mxu0 0.0
        %516 = vmatpush2.msra.mxu0 0.0
        %517 = vmatprep.subr.mxu0 0.0
        %518 = vmatpush2.msra.mxu0 0.0
        %519 = vmatprep.mubr.f32.mxu0 0.0
        %v520 = vand.u32 %v299, 4294901760
        %v521 = vsub.f32 %v299, %v520
        %522 = vmatmul.mubr.f32.gmra.mxu0 %v521
        %v523 = vpop.f32.mrf.mxu0
        %v524 = vadd.f32 %v450, %v523
        %v525 = vpop.f32.mrf.mxu0
        %526 = vdwg.mxu0
        %527 = vmatprep.subr.mxu0 0.0
        %528 = vmatpush1.msra.mxu0 0.0
        %529 = vmatprep.subr.mxu0 0.0
        %530 = vmatpush1.msra.mxu0 0.0
        %531 = vmatprep.subr.mxu0 0.0
        %532 = vmatpush1.msra.mxu0 0.0
        %533 = vmatprep.subr.mxu0 0.0
        %534 = vmatpush1.msra.mxu0 0.0
        %535 = vmatprep.subr.mxu0 0.0
        %536 = vmatpush1.msra.mxu0 0.0
        %537 = vmatprep.subr.mxu0 0.0
        %538 = vmatpush1.msra.mxu0 0.0
        %539 = vmatprep.subr.mxu0 0.0
        %540 = vmatpush1.msra.mxu0 0.0
        %541 = vmatprep.subr.mxu0 0.0
        %542 = vmatpush1.msra.mxu0 0.0
        %543 = vmatprep.subr.mxu0 0.0
        %544 = vmatpush1.msra.mxu0 0.0
        %545 = vmatprep.subr.mxu0 0.0
        %546 = vmatpush1.msra.mxu0 0.0
        %547 = vmatprep.subr.mxu0 0.0
        %548 = vmatpush1.msra.mxu0 0.0
        %549 = vmatprep.subr.mxu0 0.0
        %550 = vmatpush1.msra.mxu0 0.0
        %551 = vmatprep.subr.mxu0 0.0
        %552 = vmatpush1.msra.mxu0 0.0
        %553 = vmatprep.subr.mxu0 0.0
        %554 = vmatpush1.msra.mxu0 0.0
        %555 = vmatprep.subr.mxu0 0.0
        %556 = vmatpush1.msra.mxu0 0.0
        %557 = vmatprep.subr.mxu0 0.0
        %v558 = vand.u32 %v296, 4294901760
        %559 = vmatpush1.msra.mxu0 %v558
        %560 = vmatprep.subr.mxu0 0.0
        %561 = vmatpush2.msra.mxu0 0.0
        %562 = vmatprep.subr.mxu0 0.0
        %563 = vmatpush2.msra.mxu0 0.0
        %564 = vmatprep.subr.mxu0 0.0
        %565 = vmatpush2.msra.mxu0 0.0
        %566 = vmatprep.subr.mxu0 0.0
        %567 = vmatpush2.msra.mxu0 0.0
        %568 = vmatprep.subr.mxu0 0.0
        %569 = vmatpush2.msra.mxu0 0.0
        %570 = vmatprep.subr.mxu0 0.0
        %571 = vmatpush2.msra.mxu0 0.0
        %572 = vmatprep.subr.mxu0 0.0
        %573 = vmatpush2.msra.mxu0 0.0
        %574 = vmatprep.subr.mxu0 0.0
        %575 = vmatpush2.msra.mxu0 0.0
        %576 = vmatprep.subr.mxu0 0.0
        %577 = vmatpush2.msra.mxu0 0.0
        %578 = vmatprep.subr.mxu0 0.0
        %579 = vmatpush2.msra.mxu0 0.0
        %580 = vmatprep.subr.mxu0 0.0
        %581 = vmatpush2.msra.mxu0 0.0
        %582 = vmatprep.subr.mxu0 0.0
        %583 = vmatpush2.msra.mxu0 0.0
        %584 = vmatprep.subr.mxu0 0.0
        %585 = vmatpush2.msra.mxu0 0.0
        %586 = vmatprep.subr.mxu0 0.0
        %587 = vmatpush2.msra.mxu0 0.0
        %588 = vmatprep.subr.mxu0 0.0
        %589 = vmatpush2.msra.mxu0 0.0
        %590 = vmatprep.subr.mxu0 0.0
        %591 = vmatpush2.msra.mxu0 0.0
        %592 = vmatprep.mubr.f32.mxu0 0.0
        %v593 = vand.u32 %v299, 4294901760
        %v594 = vsub.f32 %v299, %v593
        %v595 = vand.u32 %v594, 4294901760
        %596 = vmatmul.mubr.f32.gmra.mxu0 %v595
        %v597 = vpop.f32.mrf.mxu0
        %v598 = vadd.f32 %v524, %v597
        %v599 = vpop.f32.mrf.mxu0
        %600 = vdwg.mxu0
        %601 = vmatprep.subr.mxu0 0.0
        %602 = vmatpush1.msra.mxu0 0.0
        %603 = vmatprep.subr.mxu0 0.0
        %604 = vmatpush1.msra.mxu0 0.0
        %605 = vmatprep.subr.mxu0 0.0
        %606 = vmatpush1.msra.mxu0 0.0
        %607 = vmatprep.subr.mxu0 0.0
        %608 = vmatpush1.msra.mxu0 0.0
        %609 = vmatprep.subr.mxu0 0.0
        %610 = vmatpush1.msra.mxu0 0.0
        %611 = vmatprep.subr.mxu0 0.0
        %612 = vmatpush1.msra.mxu0 0.0
        %613 = vmatprep.subr.mxu0 0.0
        %614 = vmatpush1.msra.mxu0 0.0
        %615 = vmatprep.subr.mxu0 0.0
        %616 = vmatpush1.msra.mxu0 0.0
        %617 = vmatprep.subr.mxu0 0.0
        %618 = vmatpush1.msra.mxu0 0.0
        %619 = vmatprep.subr.mxu0 0.0
        %620 = vmatpush1.msra.mxu0 0.0
        %621 = vmatprep.subr.mxu0 0.0
        %622 = vmatpush1.msra.mxu0 0.0
        %623 = vmatprep.subr.mxu0 0.0
        %624 = vmatpush1.msra.mxu0 0.0
        %625 = vmatprep.subr.mxu0 0.0
        %626 = vmatpush1.msra.mxu0 0.0
        %627 = vmatprep.subr.mxu0 0.0
        %628 = vmatpush1.msra.mxu0 0.0
        %629 = vmatprep.subr.mxu0 0.0
        %630 = vmatpush1.msra.mxu0 0.0
        %631 = vmatprep.subr.mxu0 0.0
        %v632 = vand.u32 %v296, 4294901760
        %v633 = vsub.f32 %v296, %v632
        %v634 = vand.u32 %v633, 4294901760
        %635 = vmatpush1.msra.mxu0 %v634
        %636 = vmatprep.subr.mxu0 0.0
        %637 = vmatpush2.msra.mxu0 0.0
        %638 = vmatprep.subr.mxu0 0.0
        %639 = vmatpush2.msra.mxu0 0.0
        %640 = vmatprep.subr.mxu0 0.0
        %641 = vmatpush2.msra.mxu0 0.0
        %642 = vmatprep.subr.mxu0 0.0
        %643 = vmatpush2.msra.mxu0 0.0
        %644 = vmatprep.subr.mxu0 0.0
        %645 = vmatpush2.msra.mxu0 0.0
        %646 = vmatprep.subr.mxu0 0.0
        %647 = vmatpush2.msra.mxu0 0.0
        %648 = vmatprep.subr.mxu0 0.0
        %649 = vmatpush2.msra.mxu0 0.0
        %650 = vmatprep.subr.mxu0 0.0
        %651 = vmatpush2.msra.mxu0 0.0
        %652 = vmatprep.subr.mxu0 0.0
        %653 = vmatpush2.msra.mxu0 0.0
        %654 = vmatprep.subr.mxu0 0.0
        %655 = vmatpush2.msra.mxu0 0.0
        %656 = vmatprep.subr.mxu0 0.0
        %657 = vmatpush2.msra.mxu0 0.0
        %658 = vmatprep.subr.mxu0 0.0
        %659 = vmatpush2.msra.mxu0 0.0
        %660 = vmatprep.subr.mxu0 0.0
        %661 = vmatpush2.msra.mxu0 0.0
        %662 = vmatprep.subr.mxu0 0.0
        %663 = vmatpush2.msra.mxu0 0.0
        %664 = vmatprep.subr.mxu0 0.0
        %665 = vmatpush2.msra.mxu0 0.0
        %666 = vmatprep.subr.mxu0 0.0
        %667 = vmatpush2.msra.mxu0 0.0
        %668 = vmatprep.mubr.f32.mxu0 0.0
        %v669 = vand.u32 %v299, 4294901760
        %670 = vmatmul.mubr.f32.gmra.mxu0 %v669
        %v671 = vpop.f32.mrf.mxu0
        %v672 = vadd.f32 %v598, %v671
        %v673 = vpop.f32.mrf.mxu0
        %674 = vdwg.mxu0
        %675 = vmatprep.subr.mxu0 0.0
        %676 = vmatpush1.msra.mxu0 0.0
        %677 = vmatprep.subr.mxu0 0.0
        %678 = vmatpush1.msra.mxu0 0.0
        %679 = vmatprep.subr.mxu0 0.0
        %680 = vmatpush1.msra.mxu0 0.0
        %681 = vmatprep.subr.mxu0 0.0
        %682 = vmatpush1.msra.mxu0 0.0
        %683 = vmatprep.subr.mxu0 0.0
        %684 = vmatpush1.msra.mxu0 0.0
        %685 = vmatprep.subr.mxu0 0.0
        %686 = vmatpush1.msra.mxu0 0.0
        %687 = vmatprep.subr.mxu0 0.0
        %688 = vmatpush1.msra.mxu0 0.0
        %689 = vmatprep.subr.mxu0 0.0
        %690 = vmatpush1.msra.mxu0 0.0
        %691 = vmatprep.subr.mxu0 0.0
        %692 = vmatpush1.msra.mxu0 0.0
        %693 = vmatprep.subr.mxu0 0.0
        %694 = vmatpush1.msra.mxu0 0.0
        %695 = vmatprep.subr.mxu0 0.0
        %696 = vmatpush1.msra.mxu0 0.0
        %697 = vmatprep.subr.mxu0 0.0
        %698 = vmatpush1.msra.mxu0 0.0
        %699 = vmatprep.subr.mxu0 0.0
        %700 = vmatpush1.msra.mxu0 0.0
        %701 = vmatprep.subr.mxu0 0.0
        %702 = vmatpush1.msra.mxu0 0.0
        %703 = vmatprep.subr.mxu0 0.0
        %704 = vmatpush1.msra.mxu0 0.0
        %705 = vmatprep.subr.mxu0 0.0
        %v706 = vand.u32 %v296, 4294901760
        %707 = vmatpush1.msra.mxu0 %v706
        %708 = vmatprep.subr.mxu0 0.0
        %709 = vmatpush2.msra.mxu0 0.0
        %710 = vmatprep.subr.mxu0 0.0
        %711 = vmatpush2.msra.mxu0 0.0
        %712 = vmatprep.subr.mxu0 0.0
        %713 = vmatpush2.msra.mxu0 0.0
        %714 = vmatprep.subr.mxu0 0.0
        %715 = vmatpush2.msra.mxu0 0.0
        %716 = vmatprep.subr.mxu0 0.0
        %717 = vmatpush2.msra.mxu0 0.0
        %718 = vmatprep.subr.mxu0 0.0
        %719 = vmatpush2.msra.mxu0 0.0
        %720 = vmatprep.subr.mxu0 0.0
        %721 = vmatpush2.msra.mxu0 0.0
        %722 = vmatprep.subr.mxu0 0.0
        %723 = vmatpush2.msra.mxu0 0.0
        %724 = vmatprep.subr.mxu0 0.0
        %725 = vmatpush2.msra.mxu0 0.0
        %726 = vmatprep.subr.mxu0 0.0
        %727 = vmatpush2.msra.mxu0 0.0
        %728 = vmatprep.subr.mxu0 0.0
        %729 = vmatpush2.msra.mxu0 0.0
        %730 = vmatprep.subr.mxu0 0.0
        %731 = vmatpush2.msra.mxu0 0.0
        %732 = vmatprep.subr.mxu0 0.0
        %733 = vmatpush2.msra.mxu0 0.0
        %734 = vmatprep.subr.mxu0 0.0
        %735 = vmatpush2.msra.mxu0 0.0
        %736 = vmatprep.subr.mxu0 0.0
        %737 = vmatpush2.msra.mxu0 0.0
        %738 = vmatprep.subr.mxu0 0.0
        %739 = vmatpush2.msra.mxu0 0.0
        %740 = vmatprep.mubr.f32.mxu0 0.0
        %v741 = vand.u32 %v299, 4294901760
        %742 = vmatmul.mubr.f32.gmra.mxu0 %v741
        %v743 = vpop.f32.mrf.mxu0
        %v744 = vadd.f32 %v672, %v743
        %v745 = vpop.f32.mrf.mxu0
        %746 = vdwg.mxu0
        %v747 = vld [vmem:[%s2] sm:$0x1]
        %v748 = vmul.f32 %v744, %v747
        %v749 = vand.u32 2147483647, %v748
        %vm750 = vcmp.le.f32.partialorder %v749, 0.7853982
        %vm751 = vcmp.lt.s32.totalorder %v748, 0
        %v752 = vand.u32 %v748, 2139095040
        %v753 = vshrl.u32 %v752, 23
        %v754 = vsub.s32 %v753, 127
        %v755 = vand.u32 2147483647, %v748
        %v756 = vand.u32 %v755, 8388607
        %v757 = vor.u32 %v756, 8388608
        %v758 = vsub.s32 0, %v757
        %v759 = vadd.s32 %v754, 1
        %vm760 = vcmp.gt.s32.totalorder %v759, 0
        %v761 = vsel %vm760, %v759, 0
        %v762 = vshrl.u32 %v761, 5
        %v763 = vand.u32 %v761, 31
        %v764 = vsub.s32 32, %v763
        %v765 = vshrl.u32 683565275, %v764
        %v766 = vshll.u32 683565275, %v763
        %v767 = vshrl.u32 2475754826, %v764
        %v768 = vor.u32 %v766, %v767
        %v769 = vshll.u32 2475754826, %v763
        %v770 = vshrl.u32 2131351028, %v764
        %v771 = vor.u32 %v769, %v770
        %v772 = vshll.u32 2131351028, %v763
        %v773 = vshrl.u32 2102212464, %v764
        %v774 = vor.u32 %v772, %v773
        %v775 = vshll.u32 2102212464, %v763
        %v776 = vshrl.u32 920167782, %v764
        %v777 = vor.u32 %v775, %v776
        %v778 = vshll.u32 920167782, %v763
        %v779 = vshrl.u32 1326507024, %v764
        %v780 = vor.u32 %v778, %v779
        %vm781 = vcmp.lt.s32.totalorder %v762, 1
        %vm782 = vcmp.lt.s32.totalorder %v762, 2
        %vm783 = vcmp.lt.s32.totalorder %v762, 3
        %vm784 = vcmp.lt.s32.totalorder %v762, 4
        %v785 = vsel %vm781, %v765, %v768
        %v786 = vsel %vm784, %v774, 2102212464
        %v787 = vsel %vm783, %v771, %v786
        %v788 = vsel %vm782, %v785, %v787
        %v789 = vsel %vm781, %v768, %v771
        %v790 = vsel %vm784, %v777, 920167782
        %v791 = vsel %vm783, %v774, %v790
        %v792 = vsel %vm782, %v789, %v791
        %v793 = vsel %vm781, %v771, %v774
        %v794 = vsel %vm784, %v780, 1326507024
        %v795 = vsel %vm783, %v777, %v794
        %v796 = vsel %vm782, %v793, %v795
        %v797 = vshll.u32 %v757, 8
        %v798 = vmul.u32.u64.compose %v797, %v796
        %v799 = vextract.low.u32 %v798
        %v800 = vextract.high.u32 %v798
        %v801 = vmul.u32.u64.compose %v797, %v792
        %v802 = vextract.low.u32 %v801
        %v803 = vextract.high.u32 %v801
        %v804 = vmul.u32 %v797, %v788
        %v805 = vadd.s32 %v800, %v802
        %vm806 = vc.u32 %v800, %v802
        %v807 = vadd.s32 %v803, 1
        %v808 = vsel %vm806, %v807, %v803
        %v809 = vadd.s32 %v804, %v808
        %v810 = vadd.s32 %v809, 536870912
        %v811 = vshrl.u32 %v810, 30
        %v812 = vshll.u32 %v811, 30
        %v813 = vsub.s32 %v809, %v812
        %vm814 = vcmp.lt.s32.totalorder %v813, 0
        %v815 = vsub.s32 0, %v813
        %v816 = vsel %vm814, %v815, %v813
        %v817 = vclz %v816
        %v818 = vsub.s32 %v817, 2
        %vm819 = vcmp.gt.s32.totalorder 0, %v818
        %v820 = vsel %vm819, 0, %v818
        %v821 = vsub.s32 32, %v820
        %v822 = vshll.u32 %v813, %v820
        %v823 = vshrl.u32 %v805, %v821
        %v824 = vor.u32 %v822, %v823
        %v825 = vsub.s32 4294967266, %v820
        %v826 = vadd.s32 %v825, 127
        %v827 = vshll.u32 %v826, 23
        %v828 = vor.u32 4788187, %v827
        %v829 = vand.u32 2147483647, %v828
        %v831 = vcvt.s32.f32 %v824
        %v832 = vmul.f32 %v831, %v829
        %v833 = vxor.u32 %v832, 2147483648
        %v834 = vsel %vm751, %v833, %v832
        %v835 = vsub.s32 4, %v811
        %v836 = vsel %vm751, %v835, %v811
        %v837 = vsel %vm750, %v748, %v834
        %v838 = vsel %vm750, 0, %v836
        %v839 = vcosq.f32.pop %v837
        %v840 = vsinq.f32.pop %v837
        %vm841 = vweird.f32 %v748
        %v842 = vand.u32 %v838, 3
        %vm843 = vcmp.lt.s32.totalorder %v842, 2
        %vm844 = vcmp.eq.s32.totalorder %v842, 0
        %v845 = vxor.u32 %v840, 2147483648
        %v846 = vsel %vm844, %v839, %v845
        %vm847 = vcmp.eq.s32.totalorder %v842, 2
        %v848 = vxor.u32 %v839, 2147483648
        %v849 = vsel %vm847, %v848, %v840
        %v850 = vsel %vm843, %v846, %v849
        %v851 = vsel %vm841, nan, %v850
        %v852 = vand.u32 2147483647, %v748
        %vm853 = vcmp.le.f32.partialorder %v852, 0.7853982
        %vm854 = vcmp.lt.s32.totalorder %v748, 0
        %v855 = vand.u32 %v748, 2139095040
        %v856 = vshrl.u32 %v855, 23
        %v857 = vsub.s32 %v856, 127
        %v858 = vand.u32 2147483647, %v748
        %v859 = vand.u32 %v858, 8388607
        %v860 = vor.u32 %v859, 8388608
        %v861 = vsub.s32 0, %v860
        %v862 = vadd.s32 %v857, 1
        %vm863 = vcmp.gt.s32.totalorder %v862, 0
        %v864 = vsel %vm863, %v862, 0
        %v865 = vshrl.u32 %v864, 5
        %v866 = vand.u32 %v864, 31
        %v867 = vsub.s32 32, %v866
        %v868 = vshrl.u32 683565275, %v867
        %v869 = vshll.u32 683565275, %v866
        %v870 = vshrl.u32 2475754826, %v867
        %v871 = vor.u32 %v869, %v870
        %v872 = vshll.u32 2475754826, %v866
        %v873 = vshrl.u32 2131351028, %v867
        %v874 = vor.u32 %v872, %v873
        %v875 = vshll.u32 2131351028, %v866
        %v876 = vshrl.u32 2102212464, %v867
        %v877 = vor.u32 %v875, %v876
        %v878 = vshll.u32 2102212464, %v866
        %v879 = vshrl.u32 920167782, %v867
        %v880 = vor.u32 %v878, %v879
        %v881 = vshll.u32 920167782, %v866
        %v882 = vshrl.u32 1326507024, %v867
        %v883 = vor.u32 %v881, %v882
        %vm884 = vcmp.lt.s32.totalorder %v865, 1
        %vm885 = vcmp.lt.s32.totalorder %v865, 2
        %vm886 = vcmp.lt.s32.totalorder %v865, 3
        %vm887 = vcmp.lt.s32.totalorder %v865, 4
        %v888 = vsel %vm884, %v868, %v871
        %v889 = vsel %vm887, %v877, 2102212464
        %v890 = vsel %vm886, %v874, %v889
        %v891 = vsel %vm885, %v888, %v890
        %v892 = vsel %vm884, %v871, %v874
        %v893 = vsel %vm887, %v880, 920167782
        %v894 = vsel %vm886, %v877, %v893
        %v895 = vsel %vm885, %v892, %v894
        %v896 = vsel %vm884, %v874, %v877
        %v897 = vsel %vm887, %v883, 1326507024
        %v898 = vsel %vm886, %v880, %v897
        %v899 = vsel %vm885, %v896, %v898
        %v900 = vshll.u32 %v860, 8
        %v901 = vmul.u32.u64.compose %v900, %v899
        %v902 = vextract.low.u32 %v901
        %v903 = vextract.high.u32 %v901
        %v904 = vmul.u32.u64.compose %v900, %v895
        %v905 = vextract.low.u32 %v904
        %v906 = vextract.high.u32 %v904
        %v907 = vmul.u32 %v900, %v891
        %v908 = vadd.s32 %v903, %v905
        %vm909 = vc.u32 %v903, %v905
        %v910 = vadd.s32 %v906, 1
        %v911 = vsel %vm909, %v910, %v906
        %v912 = vadd.s32 %v907, %v911
        %v913 = vadd.s32 %v912, 536870912
        %v914 = vshrl.u32 %v913, 30
        %v915 = vshll.u32 %v914, 30
        %v916 = vsub.s32 %v912, %v915
        %vm917 = vcmp.lt.s32.totalorder %v916, 0
        %v918 = vsub.s32 0, %v916
        %v919 = vsel %vm917, %v918, %v916
        %v920 = vclz %v919
        %v921 = vsub.s32 %v920, 2
        %vm922 = vcmp.gt.s32.totalorder 0, %v921
        %v923 = vsel %vm922, 0, %v921
        %v924 = vsub.s32 32, %v923
        %v925 = vshll.u32 %v916, %v923
        %v926 = vshrl.u32 %v908, %v924
        %v927 = vor.u32 %v925, %v926
        %v928 = vsub.s32 4294967266, %v923
        %v929 = vadd.s32 %v928, 127
        %v930 = vshll.u32 %v929, 23
        %v931 = vor.u32 4788187, %v930
        %v932 = vand.u32 2147483647, %v931
        %v934 = vcvt.s32.f32 %v927
        %v935 = vmul.f32 %v934, %v932
        %v936 = vxor.u32 %v935, 2147483648
        %v937 = vsel %vm854, %v936, %v935
        %v938 = vsub.s32 4, %v914
        %v939 = vsel %vm854, %v938, %v914
        %v940 = vsel %vm853, %v748, %v937
        %v941 = vsel %vm853, 0, %v939
        %v942 = vcosq.f32.pop %v940
        %v943 = vsinq.f32.pop %v940
        %vm944 = vweird.f32 %v748
        %v945 = vadd.s32 %v941, 3
        %v946 = vand.u32 %v945, 3
        %vm947 = vcmp.lt.s32.totalorder %v946, 2
        %vm948 = vcmp.eq.s32.totalorder %v946, 0
        %v949 = vxor.u32 %v943, 2147483648
        %v950 = vsel %vm948, %v942, %v949
        %vm951 = vcmp.eq.s32.totalorder %v946, 2
        %v952 = vxor.u32 %v942, 2147483648
        %v953 = vsel %vm951, %v952, %v943
        %v954 = vsel %vm947, %v950, %v953
        %v955 = vsel %vm944, nan, %v954
        %v956 = vld [vmem:[#allocation7] sm:$0xff]
        %v957 = vld [vmem:[#allocation7 + $0x8] sm:$0xff]
        %v958 = vld [vmem:[#allocation7 + $0x10] sm:$0xff]
        %v959 = vld [vmem:[#allocation7 + $0x18] sm:$0xff]
        %v960 = vld [vmem:[#allocation7 + $0x20] sm:$0xff]
        %v961 = vld [vmem:[#allocation7 + $0x28] sm:$0xff]
        %v962 = vld [vmem:[#allocation7 + $0x30] sm:$0xff]
        %v963 = vld [vmem:[#allocation7 + $0x38] sm:$0xff]
        %v964 = vld [vmem:[#allocation7 + $0x40] sm:$0xff]
        %v965 = vld [vmem:[#allocation7 + $0x48] sm:$0xff]
        %v966 = vld [vmem:[#allocation7 + $0x50] sm:$0xff]
        %v967 = vld [vmem:[#allocation7 + $0x58] sm:$0xff]
        %v968 = vld [vmem:[#allocation7 + $0x60] sm:$0xff]
        %v969 = vld [vmem:[#allocation7 + $0x68] sm:$0xff]
        %v970 = vld [vmem:[#allocation7 + $0x70] sm:$0xff]
        %v971 = vld [vmem:[#allocation7 + $0x78] sm:$0xff]
        %v972 = vld [vmem:[#allocation7 + $0x80] sm:$0xff]
        %v973 = vld [vmem:[#allocation7 + $0x88] sm:$0xff]
        %v974 = vld [vmem:[#allocation7 + $0x90] sm:$0xff]
        %v975 = vld [vmem:[#allocation7 + $0x98] sm:$0xff]
        %v976 = vld [vmem:[#allocation7 + $0xa0] sm:$0xff]
        %v977 = vld [vmem:[#allocation7 + $0xa8] sm:$0xff]
        %v978 = vld [vmem:[#allocation7 + $0xb0] sm:$0xff]
        %v979 = vld [vmem:[#allocation7 + $0xb8] sm:$0xff]
        %v980 = vld [vmem:[#allocation7 + $0xc0] sm:$0xff]
        %v981 = vld [vmem:[#allocation7 + $0xc8] sm:$0xff]
        %v982 = vld [vmem:[#allocation7 + $0xd0] sm:$0xff]
        %v983 = vld [vmem:[#allocation7 + $0xd8] sm:$0xff]
        %v984 = vld [vmem:[#allocation7 + $0xe0] sm:$0xff]
        %v985 = vld [vmem:[#allocation7 + $0xe8] sm:$0xff]
        %v986 = vld [vmem:[#allocation7 + $0xf0] sm:$0xff]
        %v987 = vld [vmem:[#allocation7 + $0xf8] sm:$0xff]
        %v988 = vand.u32 %v987, 4294901760
        %989 = vmatprep.subr.mxu0 %v988
        %v990 = vand.u32 %v986, 4294901760
        %991 = vmatpush1.msra.mxu0 %v990
        %v992 = vand.u32 %v985, 4294901760
        %993 = vmatprep.subr.mxu0 %v992
        %v994 = vand.u32 %v984, 4294901760
        %995 = vmatpush1.msra.mxu0 %v994
        %v996 = vand.u32 %v983, 4294901760
        %997 = vmatprep.subr.mxu0 %v996
        %v998 = vand.u32 %v982, 4294901760
        %999 = vmatpush1.msra.mxu0 %v998
        %v1000 = vand.u32 %v981, 4294901760
        %1001 = vmatprep.subr.mxu0 %v1000
        %v1002 = vand.u32 %v980, 4294901760
        %1003 = vmatpush1.msra.mxu0 %v1002
        %v1004 = vand.u32 %v979, 4294901760
        %1005 = vmatprep.subr.mxu0 %v1004
        %v1006 = vand.u32 %v978, 4294901760
        %1007 = vmatpush1.msra.mxu0 %v1006
        %v1008 = vand.u32 %v977, 4294901760
        %1009 = vmatprep.subr.mxu0 %v1008
        %v1010 = vand.u32 %v976, 4294901760
        %1011 = vmatpush1.msra.mxu0 %v1010
        %v1012 = vand.u32 %v975, 4294901760
        %1013 = vmatprep.subr.mxu0 %v1012
        %v1014 = vand.u32 %v974, 4294901760
        %1015 = vmatpush1.msra.mxu0 %v1014
        %v1016 = vand.u32 %v973, 4294901760
        %1017 = vmatprep.subr.mxu0 %v1016
        %v1018 = vand.u32 %v972, 4294901760
        %1019 = vmatpush1.msra.mxu0 %v1018
        %v1020 = vand.u32 %v971, 4294901760
        %1021 = vmatprep.subr.mxu0 %v1020
        %v1022 = vand.u32 %v970, 4294901760
        %1023 = vmatpush1.msra.mxu0 %v1022
        %v1024 = vand.u32 %v969, 4294901760
        %1025 = vmatprep.subr.mxu0 %v1024
        %v1026 = vand.u32 %v968, 4294901760
        %1027 = vmatpush1.msra.mxu0 %v1026
        %v1028 = vand.u32 %v967, 4294901760
        %1029 = vmatprep.subr.mxu0 %v1028
        %v1030 = vand.u32 %v966, 4294901760
        %1031 = vmatpush1.msra.mxu0 %v1030
        %v1032 = vand.u32 %v965, 4294901760
        %1033 = vmatprep.subr.mxu0 %v1032
        %v1034 = vand.u32 %v964, 4294901760
        %1035 = vmatpush1.msra.mxu0 %v1034
        %v1036 = vand.u32 %v963, 4294901760
        %1037 = vmatprep.subr.mxu0 %v1036
        %v1038 = vand.u32 %v962, 4294901760
        %1039 = vmatpush1.msra.mxu0 %v1038
        %v1040 = vand.u32 %v961, 4294901760
        %1041 = vmatprep.subr.mxu0 %v1040
        %v1042 = vand.u32 %v960, 4294901760
        %1043 = vmatpush1.msra.mxu0 %v1042
        %v1044 = vand.u32 %v959, 4294901760
        %1045 = vmatprep.subr.mxu0 %v1044
        %v1046 = vand.u32 %v958, 4294901760
        %1047 = vmatpush1.msra.mxu0 %v1046
        %v1048 = vand.u32 %v957, 4294901760
        %1049 = vmatprep.subr.mxu0 %v1048
        %v1050 = vand.u32 %v956, 4294901760
        %1051 = vmatpush1.msra.mxu0 %v1050
        %1052 = vmatprep.subr.mxu0 0.0
        %1053 = vmatpush2.msra.mxu0 0.0
        %1054 = vmatprep.subr.mxu0 0.0
        %1055 = vmatpush2.msra.mxu0 0.0
        %1056 = vmatprep.subr.mxu0 0.0
        %1057 = vmatpush2.msra.mxu0 0.0
        %1058 = vmatprep.subr.mxu0 0.0
        %1059 = vmatpush2.msra.mxu0 0.0
        %1060 = vmatprep.subr.mxu0 0.0
        %1061 = vmatpush2.msra.mxu0 0.0
        %1062 = vmatprep.subr.mxu0 0.0
        %1063 = vmatpush2.msra.mxu0 0.0
        %1064 = vmatprep.subr.mxu0 0.0
        %1065 = vmatpush2.msra.mxu0 0.0
        %1066 = vmatprep.subr.mxu0 0.0
        %1067 = vmatpush2.msra.mxu0 0.0
        %1068 = vmatprep.subr.mxu0 0.0
        %1069 = vmatpush2.msra.mxu0 0.0
        %1070 = vmatprep.subr.mxu0 0.0
        %1071 = vmatpush2.msra.mxu0 0.0
        %1072 = vmatprep.subr.mxu0 0.0
        %1073 = vmatpush2.msra.mxu0 0.0
        %1074 = vmatprep.subr.mxu0 0.0
        %1075 = vmatpush2.msra.mxu0 0.0
        %1076 = vmatprep.subr.mxu0 0.0
        %1077 = vmatpush2.msra.mxu0 0.0
        %1078 = vmatprep.subr.mxu0 0.0
        %1079 = vmatpush2.msra.mxu0 0.0
        %1080 = vmatprep.subr.mxu0 0.0
        %1081 = vmatpush2.msra.mxu0 0.0
        %1082 = vmatprep.subr.mxu0 0.0
        %1083 = vmatpush2.msra.mxu0 0.0
        %1084 = vmatprep.mubr.f32.mxu0 0.0
        %v1085 = vand.u32 %v851, 4294901760
        %v1086 = vsub.f32 %v851, %v1085
        %v1087 = vand.u32 %v1086, 4294901760
        %v1088 = vsub.f32 %v1086, %v1087
        %v1089 = vand.u32 %v1088, 4294901760
        %1090 = vmatmul.mubr.f32.gmra.mxu0 %v1089
        %v1091 = vpop.f32.mrf.mxu0
        %v1092 = vadd.f32 0.0, %v1091
        %v1093 = vpop.f32.mrf.mxu0
        %v1094 = vadd.f32 0.0, %v1093
        %1095 = vdwg.mxu0
        %v1096 = vand.u32 %v987, 4294901760
        %v1097 = vsub.f32 %v987, %v1096
        %v1098 = vand.u32 %v1097, 4294901760
        %v1099 = vsub.f32 %v1097, %v1098
        %v1100 = vand.u32 %v1099, 4294901760
        %1101 = vmatprep.subr.mxu0 %v1100
        %v1102 = vand.u32 %v986, 4294901760
        %v1103 = vsub.f32 %v986, %v1102
        %v1104 = vand.u32 %v1103, 4294901760
        %v1105 = vsub.f32 %v1103, %v1104
        %v1106 = vand.u32 %v1105, 4294901760
        %1107 = vmatpush1.msra.mxu0 %v1106
        %v1108 = vand.u32 %v985, 4294901760
        %v1109 = vsub.f32 %v985, %v1108
        %v1110 = vand.u32 %v1109, 4294901760
        %v1111 = vsub.f32 %v1109, %v1110
        %v1112 = vand.u32 %v1111, 4294901760
        %1113 = vmatprep.subr.mxu0 %v1112
        %v1114 = vand.u32 %v984, 4294901760
        %v1115 = vsub.f32 %v984, %v1114
        %v1116 = vand.u32 %v1115, 4294901760
        %v1117 = vsub.f32 %v1115, %v1116
        %v1118 = vand.u32 %v1117, 4294901760
        %1119 = vmatpush1.msra.mxu0 %v1118
        %v1120 = vand.u32 %v983, 4294901760
        %v1121 = vsub.f32 %v983, %v1120
        %v1122 = vand.u32 %v1121, 4294901760
        %v1123 = vsub.f32 %v1121, %v1122
        %v1124 = vand.u32 %v1123, 4294901760
        %1125 = vmatprep.subr.mxu0 %v1124
        %v1126 = vand.u32 %v982, 4294901760
        %v1127 = vsub.f32 %v982, %v1126
        %v1128 = vand.u32 %v1127, 4294901760
        %v1129 = vsub.f32 %v1127, %v1128
        %v1130 = vand.u32 %v1129, 4294901760
        %1131 = vmatpush1.msra.mxu0 %v1130
        %v1132 = vand.u32 %v981, 4294901760
        %v1133 = vsub.f32 %v981, %v1132
        %v1134 = vand.u32 %v1133, 4294901760
        %v1135 = vsub.f32 %v1133, %v1134
        %v1136 = vand.u32 %v1135, 4294901760
        %1137 = vmatprep.subr.mxu0 %v1136
        %v1138 = vand.u32 %v980, 4294901760
        %v1139 = vsub.f32 %v980, %v1138
        %v1140 = vand.u32 %v1139, 4294901760
        %v1141 = vsub.f32 %v1139, %v1140
        %v1142 = vand.u32 %v1141, 4294901760
        %1143 = vmatpush1.msra.mxu0 %v1142
        %v1144 = vand.u32 %v979, 4294901760
        %v1145 = vsub.f32 %v979, %v1144
        %v1146 = vand.u32 %v1145, 4294901760
        %v1147 = vsub.f32 %v1145, %v1146
        %v1148 = vand.u32 %v1147, 4294901760
        %1149 = vmatprep.subr.mxu0 %v1148
        %v1150 = vand.u32 %v978, 4294901760
        %v1151 = vsub.f32 %v978, %v1150
        %v1152 = vand.u32 %v1151, 4294901760
        %v1153 = vsub.f32 %v1151, %v1152
        %v1154 = vand.u32 %v1153, 4294901760
        %1155 = vmatpush1.msra.mxu0 %v1154
        %v1156 = vand.u32 %v977, 4294901760
        %v1157 = vsub.f32 %v977, %v1156
        %v1158 = vand.u32 %v1157, 4294901760
        %v1159 = vsub.f32 %v1157, %v1158
        %v1160 = vand.u32 %v1159, 4294901760
        %1161 = vmatprep.subr.mxu0 %v1160
        %v1162 = vand.u32 %v976, 4294901760
        %v1163 = vsub.f32 %v976, %v1162
        %v1164 = vand.u32 %v1163, 4294901760
        %v1165 = vsub.f32 %v1163, %v1164
        %v1166 = vand.u32 %v1165, 4294901760
        %1167 = vmatpush1.msra.mxu0 %v1166
        %v1168 = vand.u32 %v975, 4294901760
        %v1169 = vsub.f32 %v975, %v1168
        %v1170 = vand.u32 %v1169, 4294901760
        %v1171 = vsub.f32 %v1169, %v1170
        %v1172 = vand.u32 %v1171, 4294901760
        %1173 = vmatprep.subr.mxu0 %v1172
        %v1174 = vand.u32 %v974, 4294901760
        %v1175 = vsub.f32 %v974, %v1174
        %v1176 = vand.u32 %v1175, 4294901760
        %v1177 = vsub.f32 %v1175, %v1176
        %v1178 = vand.u32 %v1177, 4294901760
        %1179 = vmatpush1.msra.mxu0 %v1178
        %v1180 = vand.u32 %v973, 4294901760
        %v1181 = vsub.f32 %v973, %v1180
        %v1182 = vand.u32 %v1181, 4294901760
        %v1183 = vsub.f32 %v1181, %v1182
        %v1184 = vand.u32 %v1183, 4294901760
        %1185 = vmatprep.subr.mxu0 %v1184
        %v1186 = vand.u32 %v972, 4294901760
        %v1187 = vsub.f32 %v972, %v1186
        %v1188 = vand.u32 %v1187, 4294901760
        %v1189 = vsub.f32 %v1187, %v1188
        %v1190 = vand.u32 %v1189, 4294901760
        %1191 = vmatpush1.msra.mxu0 %v1190
        %v1192 = vand.u32 %v971, 4294901760
        %v1193 = vsub.f32 %v971, %v1192
        %v1194 = vand.u32 %v1193, 4294901760
        %v1195 = vsub.f32 %v1193, %v1194
        %v1196 = vand.u32 %v1195, 4294901760
        %1197 = vmatprep.subr.mxu0 %v1196
        %v1198 = vand.u32 %v970, 4294901760
        %v1199 = vsub.f32 %v970, %v1198
        %v1200 = vand.u32 %v1199, 4294901760
        %v1201 = vsub.f32 %v1199, %v1200
        %v1202 = vand.u32 %v1201, 4294901760
        %1203 = vmatpush1.msra.mxu0 %v1202
        %v1204 = vand.u32 %v969, 4294901760
        %v1205 = vsub.f32 %v969, %v1204
        %v1206 = vand.u32 %v1205, 4294901760
        %v1207 = vsub.f32 %v1205, %v1206
        %v1208 = vand.u32 %v1207, 4294901760
        %1209 = vmatprep.subr.mxu0 %v1208
        %v1210 = vand.u32 %v968, 4294901760
        %v1211 = vsub.f32 %v968, %v1210
        %v1212 = vand.u32 %v1211, 4294901760
        %v1213 = vsub.f32 %v1211, %v1212
        %v1214 = vand.u32 %v1213, 4294901760
        %1215 = vmatpush1.msra.mxu0 %v1214
        %v1216 = vand.u32 %v967, 4294901760
        %v1217 = vsub.f32 %v967, %v1216
        %v1218 = vand.u32 %v1217, 4294901760
        %v1219 = vsub.f32 %v1217, %v1218
        %v1220 = vand.u32 %v1219, 4294901760
        %1221 = vmatprep.subr.mxu0 %v1220
        %v1222 = vand.u32 %v966, 4294901760
        %v1223 = vsub.f32 %v966, %v1222
        %v1224 = vand.u32 %v1223, 4294901760
        %v1225 = vsub.f32 %v1223, %v1224
        %v1226 = vand.u32 %v1225, 4294901760
        %1227 = vmatpush1.msra.mxu0 %v1226
        %v1228 = vand.u32 %v965, 4294901760
        %v1229 = vsub.f32 %v965, %v1228
        %v1230 = vand.u32 %v1229, 4294901760
        %v1231 = vsub.f32 %v1229, %v1230
        %v1232 = vand.u32 %v1231, 4294901760
        %1233 = vmatprep.subr.mxu0 %v1232
        %v1234 = vand.u32 %v964, 4294901760
        %v1235 = vsub.f32 %v964, %v1234
        %v1236 = vand.u32 %v1235, 4294901760
        %v1237 = vsub.f32 %v1235, %v1236
        %v1238 = vand.u32 %v1237, 4294901760
        %1239 = vmatpush1.msra.mxu0 %v1238
        %v1240 = vand.u32 %v963, 4294901760
        %v1241 = vsub.f32 %v963, %v1240
        %v1242 = vand.u32 %v1241, 4294901760
        %v1243 = vsub.f32 %v1241, %v1242
        %v1244 = vand.u32 %v1243, 4294901760
        %1245 = vmatprep.subr.mxu0 %v1244
        %v1246 = vand.u32 %v962, 4294901760
        %v1247 = vsub.f32 %v962, %v1246
        %v1248 = vand.u32 %v1247, 4294901760
        %v1249 = vsub.f32 %v1247, %v1248
        %v1250 = vand.u32 %v1249, 4294901760
        %1251 = vmatpush1.msra.mxu0 %v1250
        %v1252 = vand.u32 %v961, 4294901760
        %v1253 = vsub.f32 %v961, %v1252
        %v1254 = vand.u32 %v1253, 4294901760
        %v1255 = vsub.f32 %v1253, %v1254
        %v1256 = vand.u32 %v1255, 4294901760
        %1257 = vmatprep.subr.mxu0 %v1256
        %v1258 = vand.u32 %v960, 4294901760
        %v1259 = vsub.f32 %v960, %v1258
        %v1260 = vand.u32 %v1259, 4294901760
        %v1261 = vsub.f32 %v1259, %v1260
        %v1262 = vand.u32 %v1261, 4294901760
        %1263 = vmatpush1.msra.mxu0 %v1262
        %v1264 = vand.u32 %v959, 4294901760
        %v1265 = vsub.f32 %v959, %v1264
        %v1266 = vand.u32 %v1265, 4294901760
        %v1267 = vsub.f32 %v1265, %v1266
        %v1268 = vand.u32 %v1267, 4294901760
        %1269 = vmatprep.subr.mxu0 %v1268
        %v1270 = vand.u32 %v958, 4294901760
        %v1271 = vsub.f32 %v958, %v1270
        %v1272 = vand.u32 %v1271, 4294901760
        %v1273 = vsub.f32 %v1271, %v1272
        %v1274 = vand.u32 %v1273, 4294901760
        %1275 = vmatpush1.msra.mxu0 %v1274
        %v1276 = vand.u32 %v957, 4294901760
        %v1277 = vsub.f32 %v957, %v1276
        %v1278 = vand.u32 %v1277, 4294901760
        %v1279 = vsub.f32 %v1277, %v1278
        %v1280 = vand.u32 %v1279, 4294901760
        %1281 = vmatprep.subr.mxu0 %v1280
        %v1282 = vand.u32 %v956, 4294901760
        %v1283 = vsub.f32 %v956, %v1282
        %v1284 = vand.u32 %v1283, 4294901760
        %v1285 = vsub.f32 %v1283, %v1284
        %v1286 = vand.u32 %v1285, 4294901760
        %1287 = vmatpush1.msra.mxu0 %v1286
        %1288 = vmatprep.subr.mxu0 0.0
        %1289 = vmatpush2.msra.mxu0 0.0
        %1290 = vmatprep.subr.mxu0 0.0
        %1291 = vmatpush2.msra.mxu0 0.0
        %1292 = vmatprep.subr.mxu0 0.0
        %1293 = vmatpush2.msra.mxu0 0.0
        %1294 = vmatprep.subr.mxu0 0.0
        %1295 = vmatpush2.msra.mxu0 0.0
        %1296 = vmatprep.subr.mxu0 0.0
        %1297 = vmatpush2.msra.mxu0 0.0
        %1298 = vmatprep.subr.mxu0 0.0
        %1299 = vmatpush2.msra.mxu0 0.0
        %1300 = vmatprep.subr.mxu0 0.0
        %1301 = vmatpush2.msra.mxu0 0.0
        %1302 = vmatprep.subr.mxu0 0.0
        %1303 = vmatpush2.msra.mxu0 0.0
        %1304 = vmatprep.subr.mxu0 0.0
        %1305 = vmatpush2.msra.mxu0 0.0
        %1306 = vmatprep.subr.mxu0 0.0
        %1307 = vmatpush2.msra.mxu0 0.0
        %1308 = vmatprep.subr.mxu0 0.0
        %1309 = vmatpush2.msra.mxu0 0.0
        %1310 = vmatprep.subr.mxu0 0.0
        %1311 = vmatpush2.msra.mxu0 0.0
        %1312 = vmatprep.subr.mxu0 0.0
        %1313 = vmatpush2.msra.mxu0 0.0
        %1314 = vmatprep.subr.mxu0 0.0
        %1315 = vmatpush2.msra.mxu0 0.0
        %1316 = vmatprep.subr.mxu0 0.0
        %1317 = vmatpush2.msra.mxu0 0.0
        %1318 = vmatprep.subr.mxu0 0.0
        %1319 = vmatpush2.msra.mxu0 0.0
        %1320 = vmatprep.mubr.f32.mxu0 0.0
        %v1321 = vand.u32 %v851, 4294901760
        %1322 = vmatmul.mubr.f32.gmra.mxu0 %v1321
        %v1323 = vpop.f32.mrf.mxu0
        %v1324 = vadd.f32 %v1092, %v1323
        %v1325 = vpop.f32.mrf.mxu0
        %v1326 = vadd.f32 %v1094, %v1325
        %1327 = vdwg.mxu0
        %v1328 = vand.u32 %v987, 4294901760
        %v1329 = vsub.f32 %v987, %v1328
        %1330 = vmatprep.subr.mxu0 %v1329
        %v1331 = vand.u32 %v986, 4294901760
        %v1332 = vsub.f32 %v986, %v1331
        %1333 = vmatpush1.msra.mxu0 %v1332
        %v1334 = vand.u32 %v985, 4294901760
        %v1335 = vsub.f32 %v985, %v1334
        %1336 = vmatprep.subr.mxu0 %v1335
        %v1337 = vand.u32 %v984, 4294901760
        %v1338 = vsub.f32 %v984, %v1337
        %1339 = vmatpush1.msra.mxu0 %v1338
        %v1340 = vand.u32 %v983, 4294901760
        %v1341 = vsub.f32 %v983, %v1340
        %1342 = vmatprep.subr.mxu0 %v1341
        %v1343 = vand.u32 %v982, 4294901760
        %v1344 = vsub.f32 %v982, %v1343
        %1345 = vmatpush1.msra.mxu0 %v1344
        %v1346 = vand.u32 %v981, 4294901760
        %v1347 = vsub.f32 %v981, %v1346
        %1348 = vmatprep.subr.mxu0 %v1347
        %v1349 = vand.u32 %v980, 4294901760
        %v1350 = vsub.f32 %v980, %v1349
        %1351 = vmatpush1.msra.mxu0 %v1350
        %v1352 = vand.u32 %v979, 4294901760
        %v1353 = vsub.f32 %v979, %v1352
        %1354 = vmatprep.subr.mxu0 %v1353
        %v1355 = vand.u32 %v978, 4294901760
        %v1356 = vsub.f32 %v978, %v1355
        %1357 = vmatpush1.msra.mxu0 %v1356
        %v1358 = vand.u32 %v977, 4294901760
        %v1359 = vsub.f32 %v977, %v1358
        %1360 = vmatprep.subr.mxu0 %v1359
        %v1361 = vand.u32 %v976, 4294901760
        %v1362 = vsub.f32 %v976, %v1361
        %1363 = vmatpush1.msra.mxu0 %v1362
        %v1364 = vand.u32 %v975, 4294901760
        %v1365 = vsub.f32 %v975, %v1364
        %1366 = vmatprep.subr.mxu0 %v1365
        %v1367 = vand.u32 %v974, 4294901760
        %v1368 = vsub.f32 %v974, %v1367
        %1369 = vmatpush1.msra.mxu0 %v1368
        %v1370 = vand.u32 %v973, 4294901760
        %v1371 = vsub.f32 %v973, %v1370
        %1372 = vmatprep.subr.mxu0 %v1371
        %v1373 = vand.u32 %v972, 4294901760
        %v1374 = vsub.f32 %v972, %v1373
        %1375 = vmatpush1.msra.mxu0 %v1374
        %v1376 = vand.u32 %v971, 4294901760
        %v1377 = vsub.f32 %v971, %v1376
        %1378 = vmatprep.subr.mxu0 %v1377
        %v1379 = vand.u32 %v970, 4294901760
        %v1380 = vsub.f32 %v970, %v1379
        %1381 = vmatpush1.msra.mxu0 %v1380
        %v1382 = vand.u32 %v969, 4294901760
        %v1383 = vsub.f32 %v969, %v1382
        %1384 = vmatprep.subr.mxu0 %v1383
        %v1385 = vand.u32 %v968, 4294901760
        %v1386 = vsub.f32 %v968, %v1385
        %1387 = vmatpush1.msra.mxu0 %v1386
        %v1388 = vand.u32 %v967, 4294901760
        %v1389 = vsub.f32 %v967, %v1388
        %1390 = vmatprep.subr.mxu0 %v1389
        %v1391 = vand.u32 %v966, 4294901760
        %v1392 = vsub.f32 %v966, %v1391
        %1393 = vmatpush1.msra.mxu0 %v1392
        %v1394 = vand.u32 %v965, 4294901760
        %v1395 = vsub.f32 %v965, %v1394
        %1396 = vmatprep.subr.mxu0 %v1395
        %v1397 = vand.u32 %v964, 4294901760
        %v1398 = vsub.f32 %v964, %v1397
        %1399 = vmatpush1.msra.mxu0 %v1398
        %v1400 = vand.u32 %v963, 4294901760
        %v1401 = vsub.f32 %v963, %v1400
        %1402 = vmatprep.subr.mxu0 %v1401
        %v1403 = vand.u32 %v962, 4294901760
        %v1404 = vsub.f32 %v962, %v1403
        %1405 = vmatpush1.msra.mxu0 %v1404
        %v1406 = vand.u32 %v961, 4294901760
        %v1407 = vsub.f32 %v961, %v1406
        %1408 = vmatprep.subr.mxu0 %v1407
        %v1409 = vand.u32 %v960, 4294901760
        %v1410 = vsub.f32 %v960, %v1409
        %1411 = vmatpush1.msra.mxu0 %v1410
        %v1412 = vand.u32 %v959, 4294901760
        %v1413 = vsub.f32 %v959, %v1412
        %1414 = vmatprep.subr.mxu0 %v1413
        %v1415 = vand.u32 %v958, 4294901760
        %v1416 = vsub.f32 %v958, %v1415
        %1417 = vmatpush1.msra.mxu0 %v1416
        %v1418 = vand.u32 %v957, 4294901760
        %v1419 = vsub.f32 %v957, %v1418
        %1420 = vmatprep.subr.mxu0 %v1419
        %v1421 = vand.u32 %v956, 4294901760
        %v1422 = vsub.f32 %v956, %v1421
        %1423 = vmatpush1.msra.mxu0 %v1422
        %1424 = vmatprep.subr.mxu0 0.0
        %1425 = vmatpush2.msra.mxu0 0.0
        %1426 = vmatprep.subr.mxu0 0.0
        %1427 = vmatpush2.msra.mxu0 0.0
        %1428 = vmatprep.subr.mxu0 0.0
        %1429 = vmatpush2.msra.mxu0 0.0
        %1430 = vmatprep.subr.mxu0 0.0
        %1431 = vmatpush2.msra.mxu0 0.0
        %1432 = vmatprep.subr.mxu0 0.0
        %1433 = vmatpush2.msra.mxu0 0.0
        %1434 = vmatprep.subr.mxu0 0.0
        %1435 = vmatpush2.msra.mxu0 0.0
        %1436 = vmatprep.subr.mxu0 0.0
        %1437 = vmatpush2.msra.mxu0 0.0
        %1438 = vmatprep.subr.mxu0 0.0
        %1439 = vmatpush2.msra.mxu0 0.0
        %1440 = vmatprep.subr.mxu0 0.0
        %1441 = vmatpush2.msra.mxu0 0.0
        %1442 = vmatprep.subr.mxu0 0.0
        %1443 = vmatpush2.msra.mxu0 0.0
        %1444 = vmatprep.subr.mxu0 0.0
        %1445 = vmatpush2.msra.mxu0 0.0
        %1446 = vmatprep.subr.mxu0 0.0
        %1447 = vmatpush2.msra.mxu0 0.0
        %1448 = vmatprep.subr.mxu0 0.0
        %1449 = vmatpush2.msra.mxu0 0.0
        %1450 = vmatprep.subr.mxu0 0.0
        %1451 = vmatpush2.msra.mxu0 0.0
        %1452 = vmatprep.subr.mxu0 0.0
        %1453 = vmatpush2.msra.mxu0 0.0
        %1454 = vmatprep.subr.mxu0 0.0
        %1455 = vmatpush2.msra.mxu0 0.0
        %1456 = vmatprep.mubr.f32.mxu0 0.0
        %v1457 = vand.u32 %v851, 4294901760
        %v1458 = vsub.f32 %v851, %v1457
        %1459 = vmatmul.mubr.f32.gmra.mxu0 %v1458
        %v1460 = vpop.f32.mrf.mxu0
        %v1461 = vadd.f32 %v1324, %v1460
        %v1462 = vpop.f32.mrf.mxu0
        %v1463 = vadd.f32 %v1326, %v1462
        %1464 = vdwg.mxu0
        %v1465 = vand.u32 %v987, 4294901760
        %1466 = vmatprep.subr.mxu0 %v1465
        %v1467 = vand.u32 %v986, 4294901760
        %1468 = vmatpush1.msra.mxu0 %v1467
        %v1469 = vand.u32 %v985, 4294901760
        %1470 = vmatprep.subr.mxu0 %v1469
        %v1471 = vand.u32 %v984, 4294901760
        %1472 = vmatpush1.msra.mxu0 %v1471
        %v1473 = vand.u32 %v983, 4294901760
        %1474 = vmatprep.subr.mxu0 %v1473
        %v1475 = vand.u32 %v982, 4294901760
        %1476 = vmatpush1.msra.mxu0 %v1475
        %v1477 = vand.u32 %v981, 4294901760
        %1478 = vmatprep.subr.mxu0 %v1477
        %v1479 = vand.u32 %v980, 4294901760
        %1480 = vmatpush1.msra.mxu0 %v1479
        %v1481 = vand.u32 %v979, 4294901760
        %1482 = vmatprep.subr.mxu0 %v1481
        %v1483 = vand.u32 %v978, 4294901760
        %1484 = vmatpush1.msra.mxu0 %v1483
        %v1485 = vand.u32 %v977, 4294901760
        %1486 = vmatprep.subr.mxu0 %v1485
        %v1487 = vand.u32 %v976, 4294901760
        %1488 = vmatpush1.msra.mxu0 %v1487
        %v1489 = vand.u32 %v975, 4294901760
        %1490 = vmatprep.subr.mxu0 %v1489
        %v1491 = vand.u32 %v974, 4294901760
        %1492 = vmatpush1.msra.mxu0 %v1491
        %v1493 = vand.u32 %v973, 4294901760
        %1494 = vmatprep.subr.mxu0 %v1493
        %v1495 = vand.u32 %v972, 4294901760
        %1496 = vmatpush1.msra.mxu0 %v1495
        %v1497 = vand.u32 %v971, 4294901760
        %1498 = vmatprep.subr.mxu0 %v1497
        %v1499 = vand.u32 %v970, 4294901760
        %1500 = vmatpush1.msra.mxu0 %v1499
        %v1501 = vand.u32 %v969, 4294901760
        %1502 = vmatprep.subr.mxu0 %v1501
        %v1503 = vand.u32 %v968, 4294901760
        %1504 = vmatpush1.msra.mxu0 %v1503
        %v1505 = vand.u32 %v967, 4294901760
        %1506 = vmatprep.subr.mxu0 %v1505
        %v1507 = vand.u32 %v966, 4294901760
        %1508 = vmatpush1.msra.mxu0 %v1507
        %v1509 = vand.u32 %v965, 4294901760
        %1510 = vmatprep.subr.mxu0 %v1509
        %v1511 = vand.u32 %v964, 4294901760
        %1512 = vmatpush1.msra.mxu0 %v1511
        %v1513 = vand.u32 %v963, 4294901760
        %1514 = vmatprep.subr.mxu0 %v1513
        %v1515 = vand.u32 %v962, 4294901760
        %1516 = vmatpush1.msra.mxu0 %v1515
        %v1517 = vand.u32 %v961, 4294901760
        %1518 = vmatprep.subr.mxu0 %v1517
        %v1519 = vand.u32 %v960, 4294901760
        %1520 = vmatpush1.msra.mxu0 %v1519
        %v1521 = vand.u32 %v959, 4294901760
        %1522 = vmatprep.subr.mxu0 %v1521
        %v1523 = vand.u32 %v958, 4294901760
        %1524 = vmatpush1.msra.mxu0 %v1523
        %v1525 = vand.u32 %v957, 4294901760
        %1526 = vmatprep.subr.mxu0 %v1525
        %v1527 = vand.u32 %v956, 4294901760
        %1528 = vmatpush1.msra.mxu0 %v1527
        %1529 = vmatprep.subr.mxu0 0.0
        %1530 = vmatpush2.msra.mxu0 0.0
        %1531 = vmatprep.subr.mxu0 0.0
        %1532 = vmatpush2.msra.mxu0 0.0
        %1533 = vmatprep.subr.mxu0 0.0
        %1534 = vmatpush2.msra.mxu0 0.0
        %1535 = vmatprep.subr.mxu0 0.0
        %1536 = vmatpush2.msra.mxu0 0.0
        %1537 = vmatprep.subr.mxu0 0.0
        %1538 = vmatpush2.msra.mxu0 0.0
        %1539 = vmatprep.subr.mxu0 0.0
        %1540 = vmatpush2.msra.mxu0 0.0
        %1541 = vmatprep.subr.mxu0 0.0
        %1542 = vmatpush2.msra.mxu0 0.0
        %1543 = vmatprep.subr.mxu0 0.0
        %1544 = vmatpush2.msra.mxu0 0.0
        %1545 = vmatprep.subr.mxu0 0.0
        %1546 = vmatpush2.msra.mxu0 0.0
        %1547 = vmatprep.subr.mxu0 0.0
        %1548 = vmatpush2.msra.mxu0 0.0
        %1549 = vmatprep.subr.mxu0 0.0
        %1550 = vmatpush2.msra.mxu0 0.0
        %1551 = vmatprep.subr.mxu0 0.0
        %1552 = vmatpush2.msra.mxu0 0.0
        %1553 = vmatprep.subr.mxu0 0.0
        %1554 = vmatpush2.msra.mxu0 0.0
        %1555 = vmatprep.subr.mxu0 0.0
        %1556 = vmatpush2.msra.mxu0 0.0
        %1557 = vmatprep.subr.mxu0 0.0
        %1558 = vmatpush2.msra.mxu0 0.0
        %1559 = vmatprep.subr.mxu0 0.0
        %1560 = vmatpush2.msra.mxu0 0.0
        %1561 = vmatprep.mubr.f32.mxu0 0.0
        %v1562 = vand.u32 %v851, 4294901760
        %v1563 = vsub.f32 %v851, %v1562
        %v1564 = vand.u32 %v1563, 4294901760
        %1565 = vmatmul.mubr.f32.gmra.mxu0 %v1564
        %v1566 = vpop.f32.mrf.mxu0
        %v1567 = vadd.f32 %v1461, %v1566
        %v1568 = vpop.f32.mrf.mxu0
        %v1569 = vadd.f32 %v1463, %v1568
        %1570 = vdwg.mxu0
        %v1571 = vand.u32 %v987, 4294901760
        %v1572 = vsub.f32 %v987, %v1571
        %v1573 = vand.u32 %v1572, 4294901760
        %1574 = vmatprep.subr.mxu0 %v1573
        %v1575 = vand.u32 %v986, 4294901760
        %v1576 = vsub.f32 %v986, %v1575
        %v1577 = vand.u32 %v1576, 4294901760
        %1578 = vmatpush1.msra.mxu0 %v1577
        %v1579 = vand.u32 %v985, 4294901760
        %v1580 = vsub.f32 %v985, %v1579
        %v1581 = vand.u32 %v1580, 4294901760
        %1582 = vmatprep.subr.mxu0 %v1581
        %v1583 = vand.u32 %v984, 4294901760
        %v1584 = vsub.f32 %v984, %v1583
        %v1585 = vand.u32 %v1584, 4294901760
        %1586 = vmatpush1.msra.mxu0 %v1585
        %v1587 = vand.u32 %v983, 4294901760
        %v1588 = vsub.f32 %v983, %v1587
        %v1589 = vand.u32 %v1588, 4294901760
        %1590 = vmatprep.subr.mxu0 %v1589
        %v1591 = vand.u32 %v982, 4294901760
        %v1592 = vsub.f32 %v982, %v1591
        %v1593 = vand.u32 %v1592, 4294901760
        %1594 = vmatpush1.msra.mxu0 %v1593
        %v1595 = vand.u32 %v981, 4294901760
        %v1596 = vsub.f32 %v981, %v1595
        %v1597 = vand.u32 %v1596, 4294901760
        %1598 = vmatprep.subr.mxu0 %v1597
        %v1599 = vand.u32 %v980, 4294901760
        %v1600 = vsub.f32 %v980, %v1599
        %v1601 = vand.u32 %v1600, 4294901760
        %1602 = vmatpush1.msra.mxu0 %v1601
        %v1603 = vand.u32 %v979, 4294901760
        %v1604 = vsub.f32 %v979, %v1603
        %v1605 = vand.u32 %v1604, 4294901760
        %1606 = vmatprep.subr.mxu0 %v1605
        %v1607 = vand.u32 %v978, 4294901760
        %v1608 = vsub.f32 %v978, %v1607
        %v1609 = vand.u32 %v1608, 4294901760
        %1610 = vmatpush1.msra.mxu0 %v1609
        %v1611 = vand.u32 %v977, 4294901760
        %v1612 = vsub.f32 %v977, %v1611
        %v1613 = vand.u32 %v1612, 4294901760
        %1614 = vmatprep.subr.mxu0 %v1613
        %v1615 = vand.u32 %v976, 4294901760
        %v1616 = vsub.f32 %v976, %v1615
        %v1617 = vand.u32 %v1616, 4294901760
        %1618 = vmatpush1.msra.mxu0 %v1617
        %v1619 = vand.u32 %v975, 4294901760
        %v1620 = vsub.f32 %v975, %v1619
        %v1621 = vand.u32 %v1620, 4294901760
        %1622 = vmatprep.subr.mxu0 %v1621
        %v1623 = vand.u32 %v974, 4294901760
        %v1624 = vsub.f32 %v974, %v1623
        %v1625 = vand.u32 %v1624, 4294901760
        %1626 = vmatpush1.msra.mxu0 %v1625
        %v1627 = vand.u32 %v973, 4294901760
        %v1628 = vsub.f32 %v973, %v1627
        %v1629 = vand.u32 %v1628, 4294901760
        %1630 = vmatprep.subr.mxu0 %v1629
        %v1631 = vand.u32 %v972, 4294901760
        %v1632 = vsub.f32 %v972, %v1631
        %v1633 = vand.u32 %v1632, 4294901760
        %1634 = vmatpush1.msra.mxu0 %v1633
        %v1635 = vand.u32 %v971, 4294901760
        %v1636 = vsub.f32 %v971, %v1635
        %v1637 = vand.u32 %v1636, 4294901760
        %1638 = vmatprep.subr.mxu0 %v1637
        %v1639 = vand.u32 %v970, 4294901760
        %v1640 = vsub.f32 %v970, %v1639
        %v1641 = vand.u32 %v1640, 4294901760
        %1642 = vmatpush1.msra.mxu0 %v1641
        %v1643 = vand.u32 %v969, 4294901760
        %v1644 = vsub.f32 %v969, %v1643
        %v1645 = vand.u32 %v1644, 4294901760
        %1646 = vmatprep.subr.mxu0 %v1645
        %v1647 = vand.u32 %v968, 4294901760
        %v1648 = vsub.f32 %v968, %v1647
        %v1649 = vand.u32 %v1648, 4294901760
        %1650 = vmatpush1.msra.mxu0 %v1649
        %v1651 = vand.u32 %v967, 4294901760
        %v1652 = vsub.f32 %v967, %v1651
        %v1653 = vand.u32 %v1652, 4294901760
        %1654 = vmatprep.subr.mxu0 %v1653
        %v1655 = vand.u32 %v966, 4294901760
        %v1656 = vsub.f32 %v966, %v1655
        %v1657 = vand.u32 %v1656, 4294901760
        %1658 = vmatpush1.msra.mxu0 %v1657
        %v1659 = vand.u32 %v965, 4294901760
        %v1660 = vsub.f32 %v965, %v1659
        %v1661 = vand.u32 %v1660, 4294901760
        %1662 = vmatprep.subr.mxu0 %v1661
        %v1663 = vand.u32 %v964, 4294901760
        %v1664 = vsub.f32 %v964, %v1663
        %v1665 = vand.u32 %v1664, 4294901760
        %1666 = vmatpush1.msra.mxu0 %v1665
        %v1667 = vand.u32 %v963, 4294901760
        %v1668 = vsub.f32 %v963, %v1667
        %v1669 = vand.u32 %v1668, 4294901760
        %1670 = vmatprep.subr.mxu0 %v1669
        %v1671 = vand.u32 %v962, 4294901760
        %v1672 = vsub.f32 %v962, %v1671
        %v1673 = vand.u32 %v1672, 4294901760
        %1674 = vmatpush1.msra.mxu0 %v1673
        %v1675 = vand.u32 %v961, 4294901760
        %v1676 = vsub.f32 %v961, %v1675
        %v1677 = vand.u32 %v1676, 4294901760
        %1678 = vmatprep.subr.mxu0 %v1677
        %v1679 = vand.u32 %v960, 4294901760
        %v1680 = vsub.f32 %v960, %v1679
        %v1681 = vand.u32 %v1680, 4294901760
        %1682 = vmatpush1.msra.mxu0 %v1681
        %v1683 = vand.u32 %v959, 4294901760
        %v1684 = vsub.f32 %v959, %v1683
        %v1685 = vand.u32 %v1684, 4294901760
        %1686 = vmatprep.subr.mxu0 %v1685
        %v1687 = vand.u32 %v958, 4294901760
        %v1688 = vsub.f32 %v958, %v1687
        %v1689 = vand.u32 %v1688, 4294901760
        %1690 = vmatpush1.msra.mxu0 %v1689
        %v1691 = vand.u32 %v957, 4294901760
        %v1692 = vsub.f32 %v957, %v1691
        %v1693 = vand.u32 %v1692, 4294901760
        %1694 = vmatprep.subr.mxu0 %v1693
        %v1695 = vand.u32 %v956, 4294901760
        %v1696 = vsub.f32 %v956, %v1695
        %v1697 = vand.u32 %v1696, 4294901760
        %1698 = vmatpush1.msra.mxu0 %v1697
        %1699 = vmatprep.subr.mxu0 0.0
        %1700 = vmatpush2.msra.mxu0 0.0
        %1701 = vmatprep.subr.mxu0 0.0
        %1702 = vmatpush2.msra.mxu0 0.0
        %1703 = vmatprep.subr.mxu0 0.0
        %1704 = vmatpush2.msra.mxu0 0.0
        %1705 = vmatprep.subr.mxu0 0.0
        %1706 = vmatpush2.msra.mxu0 0.0
        %1707 = vmatprep.subr.mxu0 0.0
        %1708 = vmatpush2.msra.mxu0 0.0
        %1709 = vmatprep.subr.mxu0 0.0
        %1710 = vmatpush2.msra.mxu0 0.0
        %1711 = vmatprep.subr.mxu0 0.0
        %1712 = vmatpush2.msra.mxu0 0.0
        %1713 = vmatprep.subr.mxu0 0.0
        %1714 = vmatpush2.msra.mxu0 0.0
        %1715 = vmatprep.subr.mxu0 0.0
        %1716 = vmatpush2.msra.mxu0 0.0
        %1717 = vmatprep.subr.mxu0 0.0
        %1718 = vmatpush2.msra.mxu0 0.0
        %1719 = vmatprep.subr.mxu0 0.0
        %1720 = vmatpush2.msra.mxu0 0.0
        %1721 = vmatprep.subr.mxu0 0.0
        %1722 = vmatpush2.msra.mxu0 0.0
        %1723 = vmatprep.subr.mxu0 0.0
        %1724 = vmatpush2.msra.mxu0 0.0
        %1725 = vmatprep.subr.mxu0 0.0
        %1726 = vmatpush2.msra.mxu0 0.0
        %1727 = vmatprep.subr.mxu0 0.0
        %1728 = vmatpush2.msra.mxu0 0.0
        %1729 = vmatprep.subr.mxu0 0.0
        %1730 = vmatpush2.msra.mxu0 0.0
        %1731 = vmatprep.mubr.f32.mxu0 0.0
        %v1732 = vand.u32 %v851, 4294901760
        %1733 = vmatmul.mubr.f32.gmra.mxu0 %v1732
        %v1734 = vpop.f32.mrf.mxu0
        %v1735 = vadd.f32 %v1567, %v1734
        %v1736 = vpop.f32.mrf.mxu0
        %v1737 = vadd.f32 %v1569, %v1736
        %1738 = vdwg.mxu0
        %v1739 = vand.u32 %v987, 4294901760
        %1740 = vmatprep.subr.mxu0 %v1739
        %v1741 = vand.u32 %v986, 4294901760
        %1742 = vmatpush1.msra.mxu0 %v1741
        %v1743 = vand.u32 %v985, 4294901760
        %1744 = vmatprep.subr.mxu0 %v1743
        %v1745 = vand.u32 %v984, 4294901760
        %1746 = vmatpush1.msra.mxu0 %v1745
        %v1747 = vand.u32 %v983, 4294901760
        %1748 = vmatprep.subr.mxu0 %v1747
        %v1749 = vand.u32 %v982, 4294901760
        %1750 = vmatpush1.msra.mxu0 %v1749
        %v1751 = vand.u32 %v981, 4294901760
        %1752 = vmatprep.subr.mxu0 %v1751
        %v1753 = vand.u32 %v980, 4294901760
        %1754 = vmatpush1.msra.mxu0 %v1753
        %v1755 = vand.u32 %v979, 4294901760
        %1756 = vmatprep.subr.mxu0 %v1755
        %v1757 = vand.u32 %v978, 4294901760
        %1758 = vmatpush1.msra.mxu0 %v1757
        %v1759 = vand.u32 %v977, 4294901760
        %1760 = vmatprep.subr.mxu0 %v1759
        %v1761 = vand.u32 %v976, 4294901760
        %1762 = vmatpush1.msra.mxu0 %v1761
        %v1763 = vand.u32 %v975, 4294901760
        %1764 = vmatprep.subr.mxu0 %v1763
        %v1765 = vand.u32 %v974, 4294901760
        %1766 = vmatpush1.msra.mxu0 %v1765
        %v1767 = vand.u32 %v973, 4294901760
        %1768 = vmatprep.subr.mxu0 %v1767
        %v1769 = vand.u32 %v972, 4294901760
        %1770 = vmatpush1.msra.mxu0 %v1769
        %v1771 = vand.u32 %v971, 4294901760
        %1772 = vmatprep.subr.mxu0 %v1771
        %v1773 = vand.u32 %v970, 4294901760
        %1774 = vmatpush1.msra.mxu0 %v1773
        %v1775 = vand.u32 %v969, 4294901760
        %1776 = vmatprep.subr.mxu0 %v1775
        %v1777 = vand.u32 %v968, 4294901760
        %1778 = vmatpush1.msra.mxu0 %v1777
        %v1779 = vand.u32 %v967, 4294901760
        %1780 = vmatprep.subr.mxu0 %v1779
        %v1781 = vand.u32 %v966, 4294901760
        %1782 = vmatpush1.msra.mxu0 %v1781
        %v1783 = vand.u32 %v965, 4294901760
        %1784 = vmatprep.subr.mxu0 %v1783
        %v1785 = vand.u32 %v964, 4294901760
        %1786 = vmatpush1.msra.mxu0 %v1785
        %v1787 = vand.u32 %v963, 4294901760
        %1788 = vmatprep.subr.mxu0 %v1787
        %v1789 = vand.u32 %v962, 4294901760
        %1790 = vmatpush1.msra.mxu0 %v1789
        %v1791 = vand.u32 %v961, 4294901760
        %1792 = vmatprep.subr.mxu0 %v1791
        %v1793 = vand.u32 %v960, 4294901760
        %1794 = vmatpush1.msra.mxu0 %v1793
        %v1795 = vand.u32 %v959, 4294901760
        %1796 = vmatprep.subr.mxu0 %v1795
        %v1797 = vand.u32 %v958, 4294901760
        %1798 = vmatpush1.msra.mxu0 %v1797
        %v1799 = vand.u32 %v957, 4294901760
        %1800 = vmatprep.subr.mxu0 %v1799
        %v1801 = vand.u32 %v956, 4294901760
        %1802 = vmatpush1.msra.mxu0 %v1801
        %1803 = vmatprep.subr.mxu0 0.0
        %1804 = vmatpush2.msra.mxu0 0.0
        %1805 = vmatprep.subr.mxu0 0.0
        %1806 = vmatpush2.msra.mxu0 0.0
        %1807 = vmatprep.subr.mxu0 0.0
        %1808 = vmatpush2.msra.mxu0 0.0
        %1809 = vmatprep.subr.mxu0 0.0
        %1810 = vmatpush2.msra.mxu0 0.0
        %1811 = vmatprep.subr.mxu0 0.0
        %1812 = vmatpush2.msra.mxu0 0.0
        %1813 = vmatprep.subr.mxu0 0.0
        %1814 = vmatpush2.msra.mxu0 0.0
        %1815 = vmatprep.subr.mxu0 0.0
        %1816 = vmatpush2.msra.mxu0 0.0
        %1817 = vmatprep.subr.mxu0 0.0
        %1818 = vmatpush2.msra.mxu0 0.0
        %1819 = vmatprep.subr.mxu0 0.0
        %1820 = vmatpush2.msra.mxu0 0.0
        %1821 = vmatprep.subr.mxu0 0.0
        %1822 = vmatpush2.msra.mxu0 0.0
        %1823 = vmatprep.subr.mxu0 0.0
        %1824 = vmatpush2.msra.mxu0 0.0
        %1825 = vmatprep.subr.mxu0 0.0
        %1826 = vmatpush2.msra.mxu0 0.0
        %1827 = vmatprep.subr.mxu0 0.0
        %1828 = vmatpush2.msra.mxu0 0.0
        %1829 = vmatprep.subr.mxu0 0.0
        %1830 = vmatpush2.msra.mxu0 0.0
        %1831 = vmatprep.subr.mxu0 0.0
        %1832 = vmatpush2.msra.mxu0 0.0
        %1833 = vmatprep.subr.mxu0 0.0
        %1834 = vmatpush2.msra.mxu0 0.0
        %1835 = vmatprep.mubr.f32.mxu0 0.0
        %v1836 = vand.u32 %v851, 4294901760
        %1837 = vmatmul.mubr.f32.gmra.mxu0 %v1836
        %v1838 = vpop.f32.mrf.mxu0
        %v1839 = vadd.f32 %v1735, %v1838
        %v1840 = vpop.f32.mrf.mxu0
        %v1841 = vadd.f32 %v1737, %v1840
        %1842 = vdwg.mxu0
        %v1845 = vcombine.low %v1839, %v1841
        %v1847 = vunpack.c.l.s4 1966171168
        %v1848 = vunpack.c.0.s8 %v1847
        %v1849 = vlaneseq
        %v1850 = vshrl.u32 %v1849, 7
        %v1851 = vsub.s32 %v1848, %v1850
        %v1852 = vrot.slane %v1845, %v1851
        %v1854 = vunpack.c.l.s4 1966171168
        %v1855 = vunpack.c.0.s8 %v1854
        %v1856 = vlaneseq
        %v1857 = vshrl.u32 %v1856, 7
        %v1858 = vsub.s32 %v1855, %v1857
        %v1859 = vrot.slane %v1852, %v1858
        %v1861 = vlaneseq
        %vm1862 = vcmp.ge.s32.totalorder %v1861, 0
        %vm1863 = vcmp.lt.s32.totalorder %v1861, 256
        %vm1864 = vmand %vm1862, %vm1863
        %1865 = vst.msk [vmem:[%s286] sm:$0x3] %vm1864, %v1859
        %v1866 = vld [vmem:[#allocation7] sm:$0xff]
        %v1867 = vld [vmem:[#allocation7 + $0x8] sm:$0xff]
        %v1868 = vld [vmem:[#allocation7 + $0x10] sm:$0xff]
        %v1869 = vld [vmem:[#allocation7 + $0x18] sm:$0xff]
        %v1870 = vld [vmem:[#allocation7 + $0x20] sm:$0xff]
        %v1871 = vld [vmem:[#allocation7 + $0x28] sm:$0xff]
        %v1872 = vld [vmem:[#allocation7 + $0x30] sm:$0xff]
        %v1873 = vld [vmem:[#allocation7 + $0x38] sm:$0xff]
        %v1874 = vld [vmem:[#allocation7 + $0x40] sm:$0xff]
        %v1875 = vld [vmem:[#allocation7 + $0x48] sm:$0xff]
        %v1876 = vld [vmem:[#allocation7 + $0x50] sm:$0xff]
        %v1877 = vld [vmem:[#allocation7 + $0x58] sm:$0xff]
        %v1878 = vld [vmem:[#allocation7 + $0x60] sm:$0xff]
        %v1879 = vld [vmem:[#allocation7 + $0x68] sm:$0xff]
        %v1880 = vld [vmem:[#allocation7 + $0x70] sm:$0xff]
        %v1881 = vld [vmem:[#allocation7 + $0x78] sm:$0xff]
        %v1882 = vld [vmem:[#allocation7 + $0x80] sm:$0xff]
        %v1883 = vld [vmem:[#allocation7 + $0x88] sm:$0xff]
        %v1884 = vld [vmem:[#allocation7 + $0x90] sm:$0xff]
        %v1885 = vld [vmem:[#allocation7 + $0x98] sm:$0xff]
        %v1886 = vld [vmem:[#allocation7 + $0xa0] sm:$0xff]
        %v1887 = vld [vmem:[#allocation7 + $0xa8] sm:$0xff]
        %v1888 = vld [vmem:[#allocation7 + $0xb0] sm:$0xff]
        %v1889 = vld [vmem:[#allocation7 + $0xb8] sm:$0xff]
        %v1890 = vld [vmem:[#allocation7 + $0xc0] sm:$0xff]
        %v1891 = vld [vmem:[#allocation7 + $0xc8] sm:$0xff]
        %v1892 = vld [vmem:[#allocation7 + $0xd0] sm:$0xff]
        %v1893 = vld [vmem:[#allocation7 + $0xd8] sm:$0xff]
        %v1894 = vld [vmem:[#allocation7 + $0xe0] sm:$0xff]
        %v1895 = vld [vmem:[#allocation7 + $0xe8] sm:$0xff]
        %v1896 = vld [vmem:[#allocation7 + $0xf0] sm:$0xff]
        %v1897 = vld [vmem:[#allocation7 + $0xf8] sm:$0xff]
        %v1898 = vand.u32 %v1897, 4294901760
        %1899 = vmatprep.subr.mxu0 %v1898
        %v1900 = vand.u32 %v1896, 4294901760
        %1901 = vmatpush1.msra.mxu0 %v1900
        %v1902 = vand.u32 %v1895, 4294901760
        %1903 = vmatprep.subr.mxu0 %v1902
        %v1904 = vand.u32 %v1894, 4294901760
        %1905 = vmatpush1.msra.mxu0 %v1904
        %v1906 = vand.u32 %v1893, 4294901760
        %1907 = vmatprep.subr.mxu0 %v1906
        %v1908 = vand.u32 %v1892, 4294901760
        %1909 = vmatpush1.msra.mxu0 %v1908
        %v1910 = vand.u32 %v1891, 4294901760
        %1911 = vmatprep.subr.mxu0 %v1910
        %v1912 = vand.u32 %v1890, 4294901760
        %1913 = vmatpush1.msra.mxu0 %v1912
        %v1914 = vand.u32 %v1889, 4294901760
        %1915 = vmatprep.subr.mxu0 %v1914
        %v1916 = vand.u32 %v1888, 4294901760
        %1917 = vmatpush1.msra.mxu0 %v1916
        %v1918 = vand.u32 %v1887, 4294901760
        %1919 = vmatprep.subr.mxu0 %v1918
        %v1920 = vand.u32 %v1886, 4294901760
        %1921 = vmatpush1.msra.mxu0 %v1920
        %v1922 = vand.u32 %v1885, 4294901760
        %1923 = vmatprep.subr.mxu0 %v1922
        %v1924 = vand.u32 %v1884, 4294901760
        %1925 = vmatpush1.msra.mxu0 %v1924
        %v1926 = vand.u32 %v1883, 4294901760
        %1927 = vmatprep.subr.mxu0 %v1926
        %v1928 = vand.u32 %v1882, 4294901760
        %1929 = vmatpush1.msra.mxu0 %v1928
        %v1930 = vand.u32 %v1881, 4294901760
        %1931 = vmatprep.subr.mxu0 %v1930
        %v1932 = vand.u32 %v1880, 4294901760
        %1933 = vmatpush1.msra.mxu0 %v1932
        %v1934 = vand.u32 %v1879, 4294901760
        %1935 = vmatprep.subr.mxu0 %v1934
        %v1936 = vand.u32 %v1878, 4294901760
        %1937 = vmatpush1.msra.mxu0 %v1936
        %v1938 = vand.u32 %v1877, 4294901760
        %1939 = vmatprep.subr.mxu0 %v1938
        %v1940 = vand.u32 %v1876, 4294901760
        %1941 = vmatpush1.msra.mxu0 %v1940
        %v1942 = vand.u32 %v1875, 4294901760
        %1943 = vmatprep.subr.mxu0 %v1942
        %v1944 = vand.u32 %v1874, 4294901760
        %1945 = vmatpush1.msra.mxu0 %v1944
        %v1946 = vand.u32 %v1873, 4294901760
        %1947 = vmatprep.subr.mxu0 %v1946
        %v1948 = vand.u32 %v1872, 4294901760
        %1949 = vmatpush1.msra.mxu0 %v1948
        %v1950 = vand.u32 %v1871, 4294901760
        %1951 = vmatprep.subr.mxu0 %v1950
        %v1952 = vand.u32 %v1870, 4294901760
        %1953 = vmatpush1.msra.mxu0 %v1952
        %v1954 = vand.u32 %v1869, 4294901760
        %1955 = vmatprep.subr.mxu0 %v1954
        %v1956 = vand.u32 %v1868, 4294901760
        %1957 = vmatpush1.msra.mxu0 %v1956
        %v1958 = vand.u32 %v1867, 4294901760
        %1959 = vmatprep.subr.mxu0 %v1958
        %v1960 = vand.u32 %v1866, 4294901760
        %1961 = vmatpush1.msra.mxu0 %v1960
        %1962 = vmatprep.subr.mxu0 0.0
        %1963 = vmatpush2.msra.mxu0 0.0
        %1964 = vmatprep.subr.mxu0 0.0
        %1965 = vmatpush2.msra.mxu0 0.0
        %1966 = vmatprep.subr.mxu0 0.0
        %1967 = vmatpush2.msra.mxu0 0.0
        %1968 = vmatprep.subr.mxu0 0.0
        %1969 = vmatpush2.msra.mxu0 0.0
        %1970 = vmatprep.subr.mxu0 0.0
        %1971 = vmatpush2.msra.mxu0 0.0
        %1972 = vmatprep.subr.mxu0 0.0
        %1973 = vmatpush2.msra.mxu0 0.0
        %1974 = vmatprep.subr.mxu0 0.0
        %1975 = vmatpush2.msra.mxu0 0.0
        %1976 = vmatprep.subr.mxu0 0.0
        %1977 = vmatpush2.msra.mxu0 0.0
        %1978 = vmatprep.subr.mxu0 0.0
        %1979 = vmatpush2.msra.mxu0 0.0
        %1980 = vmatprep.subr.mxu0 0.0
        %1981 = vmatpush2.msra.mxu0 0.0
        %1982 = vmatprep.subr.mxu0 0.0
        %1983 = vmatpush2.msra.mxu0 0.0
        %1984 = vmatprep.subr.mxu0 0.0
        %1985 = vmatpush2.msra.mxu0 0.0
        %1986 = vmatprep.subr.mxu0 0.0
        %1987 = vmatpush2.msra.mxu0 0.0
        %1988 = vmatprep.subr.mxu0 0.0
        %1989 = vmatpush2.msra.mxu0 0.0
        %1990 = vmatprep.subr.mxu0 0.0
        %1991 = vmatpush2.msra.mxu0 0.0
        %1992 = vmatprep.subr.mxu0 0.0
        %1993 = vmatpush2.msra.mxu0 0.0
        %1994 = vmatprep.mubr.f32.mxu0 0.0
        %v1995 = vand.u32 %v955, 4294901760
        %v1996 = vsub.f32 %v955, %v1995
        %v1997 = vand.u32 %v1996, 4294901760
        %v1998 = vsub.f32 %v1996, %v1997
        %v1999 = vand.u32 %v1998, 4294901760
        %2000 = vmatmul.mubr.f32.gmra.mxu0 %v1999
        %v2001 = vpop.f32.mrf.mxu0
        %v2002 = vadd.f32 0.0, %v2001
        %v2003 = vpop.f32.mrf.mxu0
        %v2004 = vadd.f32 0.0, %v2003
        %2005 = vdwg.mxu0
        %v2006 = vand.u32 %v1897, 4294901760
        %v2007 = vsub.f32 %v1897, %v2006
        %v2008 = vand.u32 %v2007, 4294901760
        %v2009 = vsub.f32 %v2007, %v2008
        %v2010 = vand.u32 %v2009, 4294901760
        %2011 = vmatprep.subr.mxu0 %v2010
        %v2012 = vand.u32 %v1896, 4294901760
        %v2013 = vsub.f32 %v1896, %v2012
        %v2014 = vand.u32 %v2013, 4294901760
        %v2015 = vsub.f32 %v2013, %v2014
        %v2016 = vand.u32 %v2015, 4294901760
        %2017 = vmatpush1.msra.mxu0 %v2016
        %v2018 = vand.u32 %v1895, 4294901760
        %v2019 = vsub.f32 %v1895, %v2018
        %v2020 = vand.u32 %v2019, 4294901760
        %v2021 = vsub.f32 %v2019, %v2020
        %v2022 = vand.u32 %v2021, 4294901760
        %2023 = vmatprep.subr.mxu0 %v2022
        %v2024 = vand.u32 %v1894, 4294901760
        %v2025 = vsub.f32 %v1894, %v2024
        %v2026 = vand.u32 %v2025, 4294901760
        %v2027 = vsub.f32 %v2025, %v2026
        %v2028 = vand.u32 %v2027, 4294901760
        %2029 = vmatpush1.msra.mxu0 %v2028
        %v2030 = vand.u32 %v1893, 4294901760
        %v2031 = vsub.f32 %v1893, %v2030
        %v2032 = vand.u32 %v2031, 4294901760
        %v2033 = vsub.f32 %v2031, %v2032
        %v2034 = vand.u32 %v2033, 4294901760
        %2035 = vmatprep.subr.mxu0 %v2034
        %v2036 = vand.u32 %v1892, 4294901760
        %v2037 = vsub.f32 %v1892, %v2036
        %v2038 = vand.u32 %v2037, 4294901760
        %v2039 = vsub.f32 %v2037, %v2038
        %v2040 = vand.u32 %v2039, 4294901760
        %2041 = vmatpush1.msra.mxu0 %v2040
        %v2042 = vand.u32 %v1891, 4294901760
        %v2043 = vsub.f32 %v1891, %v2042
        %v2044 = vand.u32 %v2043, 4294901760
        %v2045 = vsub.f32 %v2043, %v2044
        %v2046 = vand.u32 %v2045, 4294901760
        %2047 = vmatprep.subr.mxu0 %v2046
        %v2048 = vand.u32 %v1890, 4294901760
        %v2049 = vsub.f32 %v1890, %v2048
        %v2050 = vand.u32 %v2049, 4294901760
        %v2051 = vsub.f32 %v2049, %v2050
        %v2052 = vand.u32 %v2051, 4294901760
        %2053 = vmatpush1.msra.mxu0 %v2052
        %v2054 = vand.u32 %v1889, 4294901760
        %v2055 = vsub.f32 %v1889, %v2054
        %v2056 = vand.u32 %v2055, 4294901760
        %v2057 = vsub.f32 %v2055, %v2056
        %v2058 = vand.u32 %v2057, 4294901760
        %2059 = vmatprep.subr.mxu0 %v2058
        %v2060 = vand.u32 %v1888, 4294901760
        %v2061 = vsub.f32 %v1888, %v2060
        %v2062 = vand.u32 %v2061, 4294901760
        %v2063 = vsub.f32 %v2061, %v2062
        %v2064 = vand.u32 %v2063, 4294901760
        %2065 = vmatpush1.msra.mxu0 %v2064
        %v2066 = vand.u32 %v1887, 4294901760
        %v2067 = vsub.f32 %v1887, %v2066
        %v2068 = vand.u32 %v2067, 4294901760
        %v2069 = vsub.f32 %v2067, %v2068
        %v2070 = vand.u32 %v2069, 4294901760
        %2071 = vmatprep.subr.mxu0 %v2070
        %v2072 = vand.u32 %v1886, 4294901760
        %v2073 = vsub.f32 %v1886, %v2072
        %v2074 = vand.u32 %v2073, 4294901760
        %v2075 = vsub.f32 %v2073, %v2074
        %v2076 = vand.u32 %v2075, 4294901760
        %2077 = vmatpush1.msra.mxu0 %v2076
        %v2078 = vand.u32 %v1885, 4294901760
        %v2079 = vsub.f32 %v1885, %v2078
        %v2080 = vand.u32 %v2079, 4294901760
        %v2081 = vsub.f32 %v2079, %v2080
        %v2082 = vand.u32 %v2081, 4294901760
        %2083 = vmatprep.subr.mxu0 %v2082
        %v2084 = vand.u32 %v1884, 4294901760
        %v2085 = vsub.f32 %v1884, %v2084
        %v2086 = vand.u32 %v2085, 4294901760
        %v2087 = vsub.f32 %v2085, %v2086
        %v2088 = vand.u32 %v2087, 4294901760
        %2089 = vmatpush1.msra.mxu0 %v2088
        %v2090 = vand.u32 %v1883, 4294901760
        %v2091 = vsub.f32 %v1883, %v2090
        %v2092 = vand.u32 %v2091, 4294901760
        %v2093 = vsub.f32 %v2091, %v2092
        %v2094 = vand.u32 %v2093, 4294901760
        %2095 = vmatprep.subr.mxu0 %v2094
        %v2096 = vand.u32 %v1882, 4294901760
        %v2097 = vsub.f32 %v1882, %v2096
        %v2098 = vand.u32 %v2097, 4294901760
        %v2099 = vsub.f32 %v2097, %v2098
        %v2100 = vand.u32 %v2099, 4294901760
        %2101 = vmatpush1.msra.mxu0 %v2100
        %v2102 = vand.u32 %v1881, 4294901760
        %v2103 = vsub.f32 %v1881, %v2102
        %v2104 = vand.u32 %v2103, 4294901760
        %v2105 = vsub.f32 %v2103, %v2104
        %v2106 = vand.u32 %v2105, 4294901760
        %2107 = vmatprep.subr.mxu0 %v2106
        %v2108 = vand.u32 %v1880, 4294901760
        %v2109 = vsub.f32 %v1880, %v2108
        %v2110 = vand.u32 %v2109, 4294901760
        %v2111 = vsub.f32 %v2109, %v2110
        %v2112 = vand.u32 %v2111, 4294901760
        %2113 = vmatpush1.msra.mxu0 %v2112
        %v2114 = vand.u32 %v1879, 4294901760
        %v2115 = vsub.f32 %v1879, %v2114
        %v2116 = vand.u32 %v2115, 4294901760
        %v2117 = vsub.f32 %v2115, %v2116
        %v2118 = vand.u32 %v2117, 4294901760
        %2119 = vmatprep.subr.mxu0 %v2118
        %v2120 = vand.u32 %v1878, 4294901760
        %v2121 = vsub.f32 %v1878, %v2120
        %v2122 = vand.u32 %v2121, 4294901760
        %v2123 = vsub.f32 %v2121, %v2122
        %v2124 = vand.u32 %v2123, 4294901760
        %2125 = vmatpush1.msra.mxu0 %v2124
        %v2126 = vand.u32 %v1877, 4294901760
        %v2127 = vsub.f32 %v1877, %v2126
        %v2128 = vand.u32 %v2127, 4294901760
        %v2129 = vsub.f32 %v2127, %v2128
        %v2130 = vand.u32 %v2129, 4294901760
        %2131 = vmatprep.subr.mxu0 %v2130
        %v2132 = vand.u32 %v1876, 4294901760
        %v2133 = vsub.f32 %v1876, %v2132
        %v2134 = vand.u32 %v2133, 4294901760
        %v2135 = vsub.f32 %v2133, %v2134
        %v2136 = vand.u32 %v2135, 4294901760
        %2137 = vmatpush1.msra.mxu0 %v2136
        %v2138 = vand.u32 %v1875, 4294901760
        %v2139 = vsub.f32 %v1875, %v2138
        %v2140 = vand.u32 %v2139, 4294901760
        %v2141 = vsub.f32 %v2139, %v2140
        %v2142 = vand.u32 %v2141, 4294901760
        %2143 = vmatprep.subr.mxu0 %v2142
        %v2144 = vand.u32 %v1874, 4294901760
        %v2145 = vsub.f32 %v1874, %v2144
        %v2146 = vand.u32 %v2145, 4294901760
        %v2147 = vsub.f32 %v2145, %v2146
        %v2148 = vand.u32 %v2147, 4294901760
        %2149 = vmatpush1.msra.mxu0 %v2148
        %v2150 = vand.u32 %v1873, 4294901760
        %v2151 = vsub.f32 %v1873, %v2150
        %v2152 = vand.u32 %v2151, 4294901760
        %v2153 = vsub.f32 %v2151, %v2152
        %v2154 = vand.u32 %v2153, 4294901760
        %2155 = vmatprep.subr.mxu0 %v2154
        %v2156 = vand.u32 %v1872, 4294901760
        %v2157 = vsub.f32 %v1872, %v2156
        %v2158 = vand.u32 %v2157, 4294901760
        %v2159 = vsub.f32 %v2157, %v2158
        %v2160 = vand.u32 %v2159, 4294901760
        %2161 = vmatpush1.msra.mxu0 %v2160
        %v2162 = vand.u32 %v1871, 4294901760
        %v2163 = vsub.f32 %v1871, %v2162
        %v2164 = vand.u32 %v2163, 4294901760
        %v2165 = vsub.f32 %v2163, %v2164
        %v2166 = vand.u32 %v2165, 4294901760
        %2167 = vmatprep.subr.mxu0 %v2166
        %v2168 = vand.u32 %v1870, 4294901760
        %v2169 = vsub.f32 %v1870, %v2168
        %v2170 = vand.u32 %v2169, 4294901760
        %v2171 = vsub.f32 %v2169, %v2170
        %v2172 = vand.u32 %v2171, 4294901760
        %2173 = vmatpush1.msra.mxu0 %v2172
        %v2174 = vand.u32 %v1869, 4294901760
        %v2175 = vsub.f32 %v1869, %v2174
        %v2176 = vand.u32 %v2175, 4294901760
        %v2177 = vsub.f32 %v2175, %v2176
        %v2178 = vand.u32 %v2177, 4294901760
        %2179 = vmatprep.subr.mxu0 %v2178
        %v2180 = vand.u32 %v1868, 4294901760
        %v2181 = vsub.f32 %v1868, %v2180
        %v2182 = vand.u32 %v2181, 4294901760
        %v2183 = vsub.f32 %v2181, %v2182
        %v2184 = vand.u32 %v2183, 4294901760
        %2185 = vmatpush1.msra.mxu0 %v2184
        %v2186 = vand.u32 %v1867, 4294901760
        %v2187 = vsub.f32 %v1867, %v2186
        %v2188 = vand.u32 %v2187, 4294901760
        %v2189 = vsub.f32 %v2187, %v2188
        %v2190 = vand.u32 %v2189, 4294901760
        %2191 = vmatprep.subr.mxu0 %v2190
        %v2192 = vand.u32 %v1866, 4294901760
        %v2193 = vsub.f32 %v1866, %v2192
        %v2194 = vand.u32 %v2193, 4294901760
        %v2195 = vsub.f32 %v2193, %v2194
        %v2196 = vand.u32 %v2195, 4294901760
        %2197 = vmatpush1.msra.mxu0 %v2196
        %2198 = vmatprep.subr.mxu0 0.0
        %2199 = vmatpush2.msra.mxu0 0.0
        %2200 = vmatprep.subr.mxu0 0.0
        %2201 = vmatpush2.msra.mxu0 0.0
        %2202 = vmatprep.subr.mxu0 0.0
        %2203 = vmatpush2.msra.mxu0 0.0
        %2204 = vmatprep.subr.mxu0 0.0
        %2205 = vmatpush2.msra.mxu0 0.0
        %2206 = vmatprep.subr.mxu0 0.0
        %2207 = vmatpush2.msra.mxu0 0.0
        %2208 = vmatprep.subr.mxu0 0.0
        %2209 = vmatpush2.msra.mxu0 0.0
        %2210 = vmatprep.subr.mxu0 0.0
        %2211 = vmatpush2.msra.mxu0 0.0
        %2212 = vmatprep.subr.mxu0 0.0
        %2213 = vmatpush2.msra.mxu0 0.0
        %2214 = vmatprep.subr.mxu0 0.0
        %2215 = vmatpush2.msra.mxu0 0.0
        %2216 = vmatprep.subr.mxu0 0.0
        %2217 = vmatpush2.msra.mxu0 0.0
        %2218 = vmatprep.subr.mxu0 0.0
        %2219 = vmatpush2.msra.mxu0 0.0
        %2220 = vmatprep.subr.mxu0 0.0
        %2221 = vmatpush2.msra.mxu0 0.0
        %2222 = vmatprep.subr.mxu0 0.0
        %2223 = vmatpush2.msra.mxu0 0.0
        %2224 = vmatprep.subr.mxu0 0.0
        %2225 = vmatpush2.msra.mxu0 0.0
        %2226 = vmatprep.subr.mxu0 0.0
        %2227 = vmatpush2.msra.mxu0 0.0
        %2228 = vmatprep.subr.mxu0 0.0
        %2229 = vmatpush2.msra.mxu0 0.0
        %2230 = vmatprep.mubr.f32.mxu0 0.0
        %v2231 = vand.u32 %v955, 4294901760
        %2232 = vmatmul.mubr.f32.gmra.mxu0 %v2231
        %v2233 = vpop.f32.mrf.mxu0
        %v2234 = vadd.f32 %v2002, %v2233
        %v2235 = vpop.f32.mrf.mxu0
        %v2236 = vadd.f32 %v2004, %v2235
        %2237 = vdwg.mxu0
        %v2238 = vand.u32 %v1897, 4294901760
        %v2239 = vsub.f32 %v1897, %v2238
        %2240 = vmatprep.subr.mxu0 %v2239
        %v2241 = vand.u32 %v1896, 4294901760
        %v2242 = vsub.f32 %v1896, %v2241
        %2243 = vmatpush1.msra.mxu0 %v2242
        %v2244 = vand.u32 %v1895, 4294901760
        %v2245 = vsub.f32 %v1895, %v2244
        %2246 = vmatprep.subr.mxu0 %v2245
        %v2247 = vand.u32 %v1894, 4294901760
        %v2248 = vsub.f32 %v1894, %v2247
        %2249 = vmatpush1.msra.mxu0 %v2248
        %v2250 = vand.u32 %v1893, 4294901760
        %v2251 = vsub.f32 %v1893, %v2250
        %2252 = vmatprep.subr.mxu0 %v2251
        %v2253 = vand.u32 %v1892, 4294901760
        %v2254 = vsub.f32 %v1892, %v2253
        %2255 = vmatpush1.msra.mxu0 %v2254
        %v2256 = vand.u32 %v1891, 4294901760
        %v2257 = vsub.f32 %v1891, %v2256
        %2258 = vmatprep.subr.mxu0 %v2257
        %v2259 = vand.u32 %v1890, 4294901760
        %v2260 = vsub.f32 %v1890, %v2259
        %2261 = vmatpush1.msra.mxu0 %v2260
        %v2262 = vand.u32 %v1889, 4294901760
        %v2263 = vsub.f32 %v1889, %v2262
        %2264 = vmatprep.subr.mxu0 %v2263
        %v2265 = vand.u32 %v1888, 4294901760
        %v2266 = vsub.f32 %v1888, %v2265
        %2267 = vmatpush1.msra.mxu0 %v2266
        %v2268 = vand.u32 %v1887, 4294901760
        %v2269 = vsub.f32 %v1887, %v2268
        %2270 = vmatprep.subr.mxu0 %v2269
        %v2271 = vand.u32 %v1886, 4294901760
        %v2272 = vsub.f32 %v1886, %v2271
        %2273 = vmatpush1.msra.mxu0 %v2272
        %v2274 = vand.u32 %v1885, 4294901760
        %v2275 = vsub.f32 %v1885, %v2274
        %2276 = vmatprep.subr.mxu0 %v2275
        %v2277 = vand.u32 %v1884, 4294901760
        %v2278 = vsub.f32 %v1884, %v2277
        %2279 = vmatpush1.msra.mxu0 %v2278
        %v2280 = vand.u32 %v1883, 4294901760
        %v2281 = vsub.f32 %v1883, %v2280
        %2282 = vmatprep.subr.mxu0 %v2281
        %v2283 = vand.u32 %v1882, 4294901760
        %v2284 = vsub.f32 %v1882, %v2283
        %2285 = vmatpush1.msra.mxu0 %v2284
        %v2286 = vand.u32 %v1881, 4294901760
        %v2287 = vsub.f32 %v1881, %v2286
        %2288 = vmatprep.subr.mxu0 %v2287
        %v2289 = vand.u32 %v1880, 4294901760
        %v2290 = vsub.f32 %v1880, %v2289
        %2291 = vmatpush1.msra.mxu0 %v2290
        %v2292 = vand.u32 %v1879, 4294901760
        %v2293 = vsub.f32 %v1879, %v2292
        %2294 = vmatprep.subr.mxu0 %v2293
        %v2295 = vand.u32 %v1878, 4294901760
        %v2296 = vsub.f32 %v1878, %v2295
        %2297 = vmatpush1.msra.mxu0 %v2296
        %v2298 = vand.u32 %v1877, 4294901760
        %v2299 = vsub.f32 %v1877, %v2298
        %2300 = vmatprep.subr.mxu0 %v2299
        %v2301 = vand.u32 %v1876, 4294901760
        %v2302 = vsub.f32 %v1876, %v2301
        %2303 = vmatpush1.msra.mxu0 %v2302
        %v2304 = vand.u32 %v1875, 4294901760
        %v2305 = vsub.f32 %v1875, %v2304
        %2306 = vmatprep.subr.mxu0 %v2305
        %v2307 = vand.u32 %v1874, 4294901760
        %v2308 = vsub.f32 %v1874, %v2307
        %2309 = vmatpush1.msra.mxu0 %v2308
        %v2310 = vand.u32 %v1873, 4294901760
        %v2311 = vsub.f32 %v1873, %v2310
        %2312 = vmatprep.subr.mxu0 %v2311
        %v2313 = vand.u32 %v1872, 4294901760
        %v2314 = vsub.f32 %v1872, %v2313
        %2315 = vmatpush1.msra.mxu0 %v2314
        %v2316 = vand.u32 %v1871, 4294901760
        %v2317 = vsub.f32 %v1871, %v2316
        %2318 = vmatprep.subr.mxu0 %v2317
        %v2319 = vand.u32 %v1870, 4294901760
        %v2320 = vsub.f32 %v1870, %v2319
        %2321 = vmatpush1.msra.mxu0 %v2320
        %v2322 = vand.u32 %v1869, 4294901760
        %v2323 = vsub.f32 %v1869, %v2322
        %2324 = vmatprep.subr.mxu0 %v2323
        %v2325 = vand.u32 %v1868, 4294901760
        %v2326 = vsub.f32 %v1868, %v2325
        %2327 = vmatpush1.msra.mxu0 %v2326
        %v2328 = vand.u32 %v1867, 4294901760
        %v2329 = vsub.f32 %v1867, %v2328
        %2330 = vmatprep.subr.mxu0 %v2329
        %v2331 = vand.u32 %v1866, 4294901760
        %v2332 = vsub.f32 %v1866, %v2331
        %2333 = vmatpush1.msra.mxu0 %v2332
        %2334 = vmatprep.subr.mxu0 0.0
        %2335 = vmatpush2.msra.mxu0 0.0
        %2336 = vmatprep.subr.mxu0 0.0
        %2337 = vmatpush2.msra.mxu0 0.0
        %2338 = vmatprep.subr.mxu0 0.0
        %2339 = vmatpush2.msra.mxu0 0.0
        %2340 = vmatprep.subr.mxu0 0.0
        %2341 = vmatpush2.msra.mxu0 0.0
        %2342 = vmatprep.subr.mxu0 0.0
        %2343 = vmatpush2.msra.mxu0 0.0
        %2344 = vmatprep.subr.mxu0 0.0
        %2345 = vmatpush2.msra.mxu0 0.0
        %2346 = vmatprep.subr.mxu0 0.0
        %2347 = vmatpush2.msra.mxu0 0.0
        %2348 = vmatprep.subr.mxu0 0.0
        %2349 = vmatpush2.msra.mxu0 0.0
        %2350 = vmatprep.subr.mxu0 0.0
        %2351 = vmatpush2.msra.mxu0 0.0
        %2352 = vmatprep.subr.mxu0 0.0
        %2353 = vmatpush2.msra.mxu0 0.0
        %2354 = vmatprep.subr.mxu0 0.0
        %2355 = vmatpush2.msra.mxu0 0.0
        %2356 = vmatprep.subr.mxu0 0.0
        %2357 = vmatpush2.msra.mxu0 0.0
        %2358 = vmatprep.subr.mxu0 0.0
        %2359 = vmatpush2.msra.mxu0 0.0
        %2360 = vmatprep.subr.mxu0 0.0
        %2361 = vmatpush2.msra.mxu0 0.0
        %2362 = vmatprep.subr.mxu0 0.0
        %2363 = vmatpush2.msra.mxu0 0.0
        %2364 = vmatprep.subr.mxu0 0.0
        %2365 = vmatpush2.msra.mxu0 0.0
        %2366 = vmatprep.mubr.f32.mxu0 0.0
        %v2367 = vand.u32 %v955, 4294901760
        %v2368 = vsub.f32 %v955, %v2367
        %2369 = vmatmul.mubr.f32.gmra.mxu0 %v2368
        %v2370 = vpop.f32.mrf.mxu0
        %v2371 = vadd.f32 %v2234, %v2370
        %v2372 = vpop.f32.mrf.mxu0
        %v2373 = vadd.f32 %v2236, %v2372
        %2374 = vdwg.mxu0
        %v2375 = vand.u32 %v1897, 4294901760
        %2376 = vmatprep.subr.mxu0 %v2375
        %v2377 = vand.u32 %v1896, 4294901760
        %2378 = vmatpush1.msra.mxu0 %v2377
        %v2379 = vand.u32 %v1895, 4294901760
        %2380 = vmatprep.subr.mxu0 %v2379
        %v2381 = vand.u32 %v1894, 4294901760
        %2382 = vmatpush1.msra.mxu0 %v2381
        %v2383 = vand.u32 %v1893, 4294901760
        %2384 = vmatprep.subr.mxu0 %v2383
        %v2385 = vand.u32 %v1892, 4294901760
        %2386 = vmatpush1.msra.mxu0 %v2385
        %v2387 = vand.u32 %v1891, 4294901760
        %2388 = vmatprep.subr.mxu0 %v2387
        %v2389 = vand.u32 %v1890, 4294901760
        %2390 = vmatpush1.msra.mxu0 %v2389
        %v2391 = vand.u32 %v1889, 4294901760
        %2392 = vmatprep.subr.mxu0 %v2391
        %v2393 = vand.u32 %v1888, 4294901760
        %2394 = vmatpush1.msra.mxu0 %v2393
        %v2395 = vand.u32 %v1887, 4294901760
        %2396 = vmatprep.subr.mxu0 %v2395
        %v2397 = vand.u32 %v1886, 4294901760
        %2398 = vmatpush1.msra.mxu0 %v2397
        %v2399 = vand.u32 %v1885, 4294901760
        %2400 = vmatprep.subr.mxu0 %v2399
        %v2401 = vand.u32 %v1884, 4294901760
        %2402 = vmatpush1.msra.mxu0 %v2401
        %v2403 = vand.u32 %v1883, 4294901760
        %2404 = vmatprep.subr.mxu0 %v2403
        %v2405 = vand.u32 %v1882, 4294901760
        %2406 = vmatpush1.msra.mxu0 %v2405
        %v2407 = vand.u32 %v1881, 4294901760
        %2408 = vmatprep.subr.mxu0 %v2407
        %v2409 = vand.u32 %v1880, 4294901760
        %2410 = vmatpush1.msra.mxu0 %v2409
        %v2411 = vand.u32 %v1879, 4294901760
        %2412 = vmatprep.subr.mxu0 %v2411
        %v2413 = vand.u32 %v1878, 4294901760
        %2414 = vmatpush1.msra.mxu0 %v2413
        %v2415 = vand.u32 %v1877, 4294901760
        %2416 = vmatprep.subr.mxu0 %v2415
        %v2417 = vand.u32 %v1876, 4294901760
        %2418 = vmatpush1.msra.mxu0 %v2417
        %v2419 = vand.u32 %v1875, 4294901760
        %2420 = vmatprep.subr.mxu0 %v2419
        %v2421 = vand.u32 %v1874, 4294901760
        %2422 = vmatpush1.msra.mxu0 %v2421
        %v2423 = vand.u32 %v1873, 4294901760
        %2424 = vmatprep.subr.mxu0 %v2423
        %v2425 = vand.u32 %v1872, 4294901760
        %2426 = vmatpush1.msra.mxu0 %v2425
        %v2427 = vand.u32 %v1871, 4294901760
        %2428 = vmatprep.subr.mxu0 %v2427
        %v2429 = vand.u32 %v1870, 4294901760
        %2430 = vmatpush1.msra.mxu0 %v2429
        %v2431 = vand.u32 %v1869, 4294901760
        %2432 = vmatprep.subr.mxu0 %v2431
        %v2433 = vand.u32 %v1868, 4294901760
        %2434 = vmatpush1.msra.mxu0 %v2433
        %v2435 = vand.u32 %v1867, 4294901760
        %2436 = vmatprep.subr.mxu0 %v2435
        %v2437 = vand.u32 %v1866, 4294901760
        %2438 = vmatpush1.msra.mxu0 %v2437
        %2439 = vmatprep.subr.mxu0 0.0
        %2440 = vmatpush2.msra.mxu0 0.0
        %2441 = vmatprep.subr.mxu0 0.0
        %2442 = vmatpush2.msra.mxu0 0.0
        %2443 = vmatprep.subr.mxu0 0.0
        %2444 = vmatpush2.msra.mxu0 0.0
        %2445 = vmatprep.subr.mxu0 0.0
        %2446 = vmatpush2.msra.mxu0 0.0
        %2447 = vmatprep.subr.mxu0 0.0
        %2448 = vmatpush2.msra.mxu0 0.0
        %2449 = vmatprep.subr.mxu0 0.0
        %2450 = vmatpush2.msra.mxu0 0.0
        %2451 = vmatprep.subr.mxu0 0.0
        %2452 = vmatpush2.msra.mxu0 0.0
        %2453 = vmatprep.subr.mxu0 0.0
        %2454 = vmatpush2.msra.mxu0 0.0
        %2455 = vmatprep.subr.mxu0 0.0
        %2456 = vmatpush2.msra.mxu0 0.0
        %2457 = vmatprep.subr.mxu0 0.0
        %2458 = vmatpush2.msra.mxu0 0.0
        %2459 = vmatprep.subr.mxu0 0.0
        %2460 = vmatpush2.msra.mxu0 0.0
        %2461 = vmatprep.subr.mxu0 0.0
        %2462 = vmatpush2.msra.mxu0 0.0
        %2463 = vmatprep.subr.mxu0 0.0
        %2464 = vmatpush2.msra.mxu0 0.0
        %2465 = vmatprep.subr.mxu0 0.0
        %2466 = vmatpush2.msra.mxu0 0.0
        %2467 = vmatprep.subr.mxu0 0.0
        %2468 = vmatpush2.msra.mxu0 0.0
        %2469 = vmatprep.subr.mxu0 0.0
        %2470 = vmatpush2.msra.mxu0 0.0
        %2471 = vmatprep.mubr.f32.mxu0 0.0
        %v2472 = vand.u32 %v955, 4294901760
        %v2473 = vsub.f32 %v955, %v2472
        %v2474 = vand.u32 %v2473, 4294901760
        %2475 = vmatmul.mubr.f32.gmra.mxu0 %v2474
        %v2476 = vpop.f32.mrf.mxu0
        %v2477 = vadd.f32 %v2371, %v2476
        %v2478 = vpop.f32.mrf.mxu0
        %v2479 = vadd.f32 %v2373, %v2478
        %2480 = vdwg.mxu0
        %v2481 = vand.u32 %v1897, 4294901760
        %v2482 = vsub.f32 %v1897, %v2481
        %v2483 = vand.u32 %v2482, 4294901760
        %2484 = vmatprep.subr.mxu0 %v2483
        %v2485 = vand.u32 %v1896, 4294901760
        %v2486 = vsub.f32 %v1896, %v2485
        %v2487 = vand.u32 %v2486, 4294901760
        %2488 = vmatpush1.msra.mxu0 %v2487
        %v2489 = vand.u32 %v1895, 4294901760
        %v2490 = vsub.f32 %v1895, %v2489
        %v2491 = vand.u32 %v2490, 4294901760
        %2492 = vmatprep.subr.mxu0 %v2491
        %v2493 = vand.u32 %v1894, 4294901760
        %v2494 = vsub.f32 %v1894, %v2493
        %v2495 = vand.u32 %v2494, 4294901760
        %2496 = vmatpush1.msra.mxu0 %v2495
        %v2497 = vand.u32 %v1893, 4294901760
        %v2498 = vsub.f32 %v1893, %v2497
        %v2499 = vand.u32 %v2498, 4294901760
        %2500 = vmatprep.subr.mxu0 %v2499
        %v2501 = vand.u32 %v1892, 4294901760
        %v2502 = vsub.f32 %v1892, %v2501
        %v2503 = vand.u32 %v2502, 4294901760
        %2504 = vmatpush1.msra.mxu0 %v2503
        %v2505 = vand.u32 %v1891, 4294901760
        %v2506 = vsub.f32 %v1891, %v2505
        %v2507 = vand.u32 %v2506, 4294901760
        %2508 = vmatprep.subr.mxu0 %v2507
        %v2509 = vand.u32 %v1890, 4294901760
        %v2510 = vsub.f32 %v1890, %v2509
        %v2511 = vand.u32 %v2510, 4294901760
        %2512 = vmatpush1.msra.mxu0 %v2511
        %v2513 = vand.u32 %v1889, 4294901760
        %v2514 = vsub.f32 %v1889, %v2513
        %v2515 = vand.u32 %v2514, 4294901760
        %2516 = vmatprep.subr.mxu0 %v2515
        %v2517 = vand.u32 %v1888, 4294901760
        %v2518 = vsub.f32 %v1888, %v2517
        %v2519 = vand.u32 %v2518, 4294901760
        %2520 = vmatpush1.msra.mxu0 %v2519
        %v2521 = vand.u32 %v1887, 4294901760
        %v2522 = vsub.f32 %v1887, %v2521
        %v2523 = vand.u32 %v2522, 4294901760
        %2524 = vmatprep.subr.mxu0 %v2523
        %v2525 = vand.u32 %v1886, 4294901760
        %v2526 = vsub.f32 %v1886, %v2525
        %v2527 = vand.u32 %v2526, 4294901760
        %2528 = vmatpush1.msra.mxu0 %v2527
        %v2529 = vand.u32 %v1885, 4294901760
        %v2530 = vsub.f32 %v1885, %v2529
        %v2531 = vand.u32 %v2530, 4294901760
        %2532 = vmatprep.subr.mxu0 %v2531
        %v2533 = vand.u32 %v1884, 4294901760
        %v2534 = vsub.f32 %v1884, %v2533
        %v2535 = vand.u32 %v2534, 4294901760
        %2536 = vmatpush1.msra.mxu0 %v2535
        %v2537 = vand.u32 %v1883, 4294901760
        %v2538 = vsub.f32 %v1883, %v2537
        %v2539 = vand.u32 %v2538, 4294901760
        %2540 = vmatprep.subr.mxu0 %v2539
        %v2541 = vand.u32 %v1882, 4294901760
        %v2542 = vsub.f32 %v1882, %v2541
        %v2543 = vand.u32 %v2542, 4294901760
        %2544 = vmatpush1.msra.mxu0 %v2543
        %v2545 = vand.u32 %v1881, 4294901760
        %v2546 = vsub.f32 %v1881, %v2545
        %v2547 = vand.u32 %v2546, 4294901760
        %2548 = vmatprep.subr.mxu0 %v2547
        %v2549 = vand.u32 %v1880, 4294901760
        %v2550 = vsub.f32 %v1880, %v2549
        %v2551 = vand.u32 %v2550, 4294901760
        %2552 = vmatpush1.msra.mxu0 %v2551
        %v2553 = vand.u32 %v1879, 4294901760
        %v2554 = vsub.f32 %v1879, %v2553
        %v2555 = vand.u32 %v2554, 4294901760
        %2556 = vmatprep.subr.mxu0 %v2555
        %v2557 = vand.u32 %v1878, 4294901760
        %v2558 = vsub.f32 %v1878, %v2557
        %v2559 = vand.u32 %v2558, 4294901760
        %2560 = vmatpush1.msra.mxu0 %v2559
        %v2561 = vand.u32 %v1877, 4294901760
        %v2562 = vsub.f32 %v1877, %v2561
        %v2563 = vand.u32 %v2562, 4294901760
        %2564 = vmatprep.subr.mxu0 %v2563
        %v2565 = vand.u32 %v1876, 4294901760
        %v2566 = vsub.f32 %v1876, %v2565
        %v2567 = vand.u32 %v2566, 4294901760
        %2568 = vmatpush1.msra.mxu0 %v2567
        %v2569 = vand.u32 %v1875, 4294901760
        %v2570 = vsub.f32 %v1875, %v2569
        %v2571 = vand.u32 %v2570, 4294901760
        %2572 = vmatprep.subr.mxu0 %v2571
        %v2573 = vand.u32 %v1874, 4294901760
        %v2574 = vsub.f32 %v1874, %v2573
        %v2575 = vand.u32 %v2574, 4294901760
        %2576 = vmatpush1.msra.mxu0 %v2575
        %v2577 = vand.u32 %v1873, 4294901760
        %v2578 = vsub.f32 %v1873, %v2577
        %v2579 = vand.u32 %v2578, 4294901760
        %2580 = vmatprep.subr.mxu0 %v2579
        %v2581 = vand.u32 %v1872, 4294901760
        %v2582 = vsub.f32 %v1872, %v2581
        %v2583 = vand.u32 %v2582, 4294901760
        %2584 = vmatpush1.msra.mxu0 %v2583
        %v2585 = vand.u32 %v1871, 4294901760
        %v2586 = vsub.f32 %v1871, %v2585
        %v2587 = vand.u32 %v2586, 4294901760
        %2588 = vmatprep.subr.mxu0 %v2587
        %v2589 = vand.u32 %v1870, 4294901760
        %v2590 = vsub.f32 %v1870, %v2589
        %v2591 = vand.u32 %v2590, 4294901760
        %2592 = vmatpush1.msra.mxu0 %v2591
        %v2593 = vand.u32 %v1869, 4294901760
        %v2594 = vsub.f32 %v1869, %v2593
        %v2595 = vand.u32 %v2594, 4294901760
        %2596 = vmatprep.subr.mxu0 %v2595
        %v2597 = vand.u32 %v1868, 4294901760
        %v2598 = vsub.f32 %v1868, %v2597
        %v2599 = vand.u32 %v2598, 4294901760
        %2600 = vmatpush1.msra.mxu0 %v2599
        %v2601 = vand.u32 %v1867, 4294901760
        %v2602 = vsub.f32 %v1867, %v2601
        %v2603 = vand.u32 %v2602, 4294901760
        %2604 = vmatprep.subr.mxu0 %v2603
        %v2605 = vand.u32 %v1866, 4294901760
        %v2606 = vsub.f32 %v1866, %v2605
        %v2607 = vand.u32 %v2606, 4294901760
        %2608 = vmatpush1.msra.mxu0 %v2607
        %2609 = vmatprep.subr.mxu0 0.0
        %2610 = vmatpush2.msra.mxu0 0.0
        %2611 = vmatprep.subr.mxu0 0.0
        %2612 = vmatpush2.msra.mxu0 0.0
        %2613 = vmatprep.subr.mxu0 0.0
        %2614 = vmatpush2.msra.mxu0 0.0
        %2615 = vmatprep.subr.mxu0 0.0
        %2616 = vmatpush2.msra.mxu0 0.0
        %2617 = vmatprep.subr.mxu0 0.0
        %2618 = vmatpush2.msra.mxu0 0.0
        %2619 = vmatprep.subr.mxu0 0.0
        %2620 = vmatpush2.msra.mxu0 0.0
        %2621 = vmatprep.subr.mxu0 0.0
        %2622 = vmatpush2.msra.mxu0 0.0
        %2623 = vmatprep.subr.mxu0 0.0
        %2624 = vmatpush2.msra.mxu0 0.0
        %2625 = vmatprep.subr.mxu0 0.0
        %2626 = vmatpush2.msra.mxu0 0.0
        %2627 = vmatprep.subr.mxu0 0.0
        %2628 = vmatpush2.msra.mxu0 0.0
        %2629 = vmatprep.subr.mxu0 0.0
        %2630 = vmatpush2.msra.mxu0 0.0
        %2631 = vmatprep.subr.mxu0 0.0
        %2632 = vmatpush2.msra.mxu0 0.0
        %2633 = vmatprep.subr.mxu0 0.0
        %2634 = vmatpush2.msra.mxu0 0.0
        %2635 = vmatprep.subr.mxu0 0.0
        %2636 = vmatpush2.msra.mxu0 0.0
        %2637 = vmatprep.subr.mxu0 0.0
        %2638 = vmatpush2.msra.mxu0 0.0
        %2639 = vmatprep.subr.mxu0 0.0
        %2640 = vmatpush2.msra.mxu0 0.0
        %2641 = vmatprep.mubr.f32.mxu0 0.0
        %v2642 = vand.u32 %v955, 4294901760
        %2643 = vmatmul.mubr.f32.gmra.mxu0 %v2642
        %v2644 = vpop.f32.mrf.mxu0
        %v2645 = vadd.f32 %v2477, %v2644
        %v2646 = vpop.f32.mrf.mxu0
        %v2647 = vadd.f32 %v2479, %v2646
        %2648 = vdwg.mxu0
        %v2649 = vand.u32 %v1897, 4294901760
        %2650 = vmatprep.subr.mxu0 %v2649
        %v2651 = vand.u32 %v1896, 4294901760
        %2652 = vmatpush1.msra.mxu0 %v2651
        %v2653 = vand.u32 %v1895, 4294901760
        %2654 = vmatprep.subr.mxu0 %v2653
        %v2655 = vand.u32 %v1894, 4294901760
        %2656 = vmatpush1.msra.mxu0 %v2655
        %v2657 = vand.u32 %v1893, 4294901760
        %2658 = vmatprep.subr.mxu0 %v2657
        %v2659 = vand.u32 %v1892, 4294901760
        %2660 = vmatpush1.msra.mxu0 %v2659
        %v2661 = vand.u32 %v1891, 4294901760
        %2662 = vmatprep.subr.mxu0 %v2661
        %v2663 = vand.u32 %v1890, 4294901760
        %2664 = vmatpush1.msra.mxu0 %v2663
        %v2665 = vand.u32 %v1889, 4294901760
        %2666 = vmatprep.subr.mxu0 %v2665
        %v2667 = vand.u32 %v1888, 4294901760
        %2668 = vmatpush1.msra.mxu0 %v2667
        %v2669 = vand.u32 %v1887, 4294901760
        %2670 = vmatprep.subr.mxu0 %v2669
        %v2671 = vand.u32 %v1886, 4294901760
        %2672 = vmatpush1.msra.mxu0 %v2671
        %v2673 = vand.u32 %v1885, 4294901760
        %2674 = vmatprep.subr.mxu0 %v2673
        %v2675 = vand.u32 %v1884, 4294901760
        %2676 = vmatpush1.msra.mxu0 %v2675
        %v2677 = vand.u32 %v1883, 4294901760
        %2678 = vmatprep.subr.mxu0 %v2677
        %v2679 = vand.u32 %v1882, 4294901760
        %2680 = vmatpush1.msra.mxu0 %v2679
        %v2681 = vand.u32 %v1881, 4294901760
        %2682 = vmatprep.subr.mxu0 %v2681
        %v2683 = vand.u32 %v1880, 4294901760
        %2684 = vmatpush1.msra.mxu0 %v2683
        %v2685 = vand.u32 %v1879, 4294901760
        %2686 = vmatprep.subr.mxu0 %v2685
        %v2687 = vand.u32 %v1878, 4294901760
        %2688 = vmatpush1.msra.mxu0 %v2687
        %v2689 = vand.u32 %v1877, 4294901760
        %2690 = vmatprep.subr.mxu0 %v2689
        %v2691 = vand.u32 %v1876, 4294901760
        %2692 = vmatpush1.msra.mxu0 %v2691
        %v2693 = vand.u32 %v1875, 4294901760
        %2694 = vmatprep.subr.mxu0 %v2693
        %v2695 = vand.u32 %v1874, 4294901760
        %2696 = vmatpush1.msra.mxu0 %v2695
        %v2697 = vand.u32 %v1873, 4294901760
        %2698 = vmatprep.subr.mxu0 %v2697
        %v2699 = vand.u32 %v1872, 4294901760
        %2700 = vmatpush1.msra.mxu0 %v2699
        %v2701 = vand.u32 %v1871, 4294901760
        %2702 = vmatprep.subr.mxu0 %v2701
        %v2703 = vand.u32 %v1870, 4294901760
        %2704 = vmatpush1.msra.mxu0 %v2703
        %v2705 = vand.u32 %v1869, 4294901760
        %2706 = vmatprep.subr.mxu0 %v2705
        %v2707 = vand.u32 %v1868, 4294901760
        %2708 = vmatpush1.msra.mxu0 %v2707
        %v2709 = vand.u32 %v1867, 4294901760
        %2710 = vmatprep.subr.mxu0 %v2709
        %v2711 = vand.u32 %v1866, 4294901760
        %2712 = vmatpush1.msra.mxu0 %v2711
        %2713 = vmatprep.subr.mxu0 0.0
        %2714 = vmatpush2.msra.mxu0 0.0
        %2715 = vmatprep.subr.mxu0 0.0
        %2716 = vmatpush2.msra.mxu0 0.0
        %2717 = vmatprep.subr.mxu0 0.0
        %2718 = vmatpush2.msra.mxu0 0.0
        %2719 = vmatprep.subr.mxu0 0.0
        %2720 = vmatpush2.msra.mxu0 0.0
        %2721 = vmatprep.subr.mxu0 0.0
        %2722 = vmatpush2.msra.mxu0 0.0
        %2723 = vmatprep.subr.mxu0 0.0
        %2724 = vmatpush2.msra.mxu0 0.0
        %2725 = vmatprep.subr.mxu0 0.0
        %2726 = vmatpush2.msra.mxu0 0.0
        %2727 = vmatprep.subr.mxu0 0.0
        %2728 = vmatpush2.msra.mxu0 0.0
        %2729 = vmatprep.subr.mxu0 0.0
        %2730 = vmatpush2.msra.mxu0 0.0
        %2731 = vmatprep.subr.mxu0 0.0
        %2732 = vmatpush2.msra.mxu0 0.0
        %2733 = vmatprep.subr.mxu0 0.0
        %2734 = vmatpush2.msra.mxu0 0.0
        %2735 = vmatprep.subr.mxu0 0.0
        %2736 = vmatpush2.msra.mxu0 0.0
        %2737 = vmatprep.subr.mxu0 0.0
        %2738 = vmatpush2.msra.mxu0 0.0
        %2739 = vmatprep.subr.mxu0 0.0
        %2740 = vmatpush2.msra.mxu0 0.0
        %2741 = vmatprep.subr.mxu0 0.0
        %2742 = vmatpush2.msra.mxu0 0.0
        %2743 = vmatprep.subr.mxu0 0.0
        %2744 = vmatpush2.msra.mxu0 0.0
        %2745 = vmatprep.mubr.f32.mxu0 0.0
        %v2746 = vand.u32 %v955, 4294901760
        %2747 = vmatmul.mubr.f32.gmra.mxu0 %v2746
        %v2748 = vpop.f32.mrf.mxu0
        %v2749 = vadd.f32 %v2645, %v2748
        %v2750 = vpop.f32.mrf.mxu0
        %v2751 = vadd.f32 %v2647, %v2750
        %2752 = vdwg.mxu0
        %v2755 = vcombine.low %v2749, %v2751
        %v2757 = vunpack.c.l.s4 1966171168
        %v2758 = vunpack.c.0.s8 %v2757
        %v2759 = vlaneseq
        %v2760 = vshrl.u32 %v2759, 7
        %v2761 = vsub.s32 %v2758, %v2760
        %v2762 = vrot.slane %v2755, %v2761
        %v2764 = vunpack.c.l.s4 1966171168
        %v2765 = vunpack.c.0.s8 %v2764
        %v2766 = vlaneseq
        %v2767 = vshrl.u32 %v2766, 7
        %v2768 = vsub.s32 %v2765, %v2767
        %v2769 = vrot.slane %v2762, %v2768
        %2771 = vst.msk [vmem:[%s293] sm:$0x3] %vm1864, %v2769
        %s2772 = sand.u32 %s140, 1
        %s2773 = scalar_lea.sflag [#allocation4], %s2772
        %s2774 = sand.u32 %s140, 1
        %s2775 = smul.addr %s2774, 2
        %s2776 = scalar_lea.vmem [#allocation8], %s2775
        %s2777 = sand.u32 %s168, 1
        %s2778 = scalar_lea.sflag [#allocation10], %s2777
        %s2779 = sand.u32 %s168, 1
        %s2780 = smul.addr %s2779, 2
        %s2781 = scalar_lea.vmem [#allocation9], %s2780
        // Predicated region
        $region49: #{tpu_custom_call.1} parent=35 // pred_check
          %p2782 = pneg %p150
        $region50: #{tpu_custom_call.1} parent=35 // pred_check_branch
          %2784 = sbr.rel (%p2782) target = $region52
        $region51: #{tpu_custom_call.1} parent=35 // pred_region
          %s2786 = ssub.s32 32, 32
          %2787 = vsyncadd %s2773, %s2786
          %s2788 = smul.addr %s32, 2
          %s2789 = smul.addr %s31, 2
          %s2790 = sadd.s32 %s2788, %s2789
          %s2791 = smul.addr %s2790, 16
          %s2792 = scalar_lea.hbm %s4, %s2791
          %s2794 = sshll.u32 %s2776, 4
          %s2795 = int_to_ptr.vmem [resolvable:$true] %s2794
          %2797 = dma.vmem_to_hbm [thread:$0]  %s2795, 32, %s2792, %s2773
        $region52: #{tpu_custom_call.1} parent=35 // pred_fallthru
          _
        // Predicated region
        $region53: #{tpu_custom_call.1} parent=35 // pred_check
          %p2798 = pneg %p178
        $region54: #{tpu_custom_call.1} parent=35 // pred_check_branch
          %2800 = sbr.rel (%p2798) target = $region56
        $region55: #{tpu_custom_call.1} parent=35 // pred_region
          %s2802 = ssub.s32 32, 32
          %2803 = vsyncadd %s2778, %s2802
          %s2804 = smul.addr %s32, 2
          %s2805 = smul.addr %s31, 2
          %s2806 = sadd.s32 %s2804, %s2805
          %s2807 = smul.addr %s2806, 16
          %s2808 = scalar_lea.hbm %s5, %s2807
          %s2810 = sshll.u32 %s2781, 4
          %s2811 = int_to_ptr.vmem [resolvable:$true] %s2810
          %2813 = dma.vmem_to_hbm [thread:$0]  %s2811, 32, %s2808, %s2778
        $region56: #{tpu_custom_call.1} parent=35 // pred_fallthru
          _
      $region36: #{tpu_custom_call.1} parent=5 // pred_fallthru
        _
      %p2814 = scmp.le.s32.totalorder 2, %s22
      // Predicated region
      $region57: #{tpu_custom_call.1} parent=5 // pred_check
        %p2815 = pneg %p2814
      $region58: #{tpu_custom_call.1} parent=5 // pred_check_branch
        %2817 = sbr.rel (%p2815) target = $region60
      $region59: #{tpu_custom_call.1} parent=5 // pred_region
        %s2818 = ssub.s32 %s22, 2
        // Predicated region
        $region61: #{tpu_custom_call.1} parent=59 // pred_check
          %p2819 = pneg %p156
        $region62: #{tpu_custom_call.1} parent=59 // pred_check_branch
          %2821 = sbr.rel (%p2819) target = $region64
        $region63: #{tpu_custom_call.1} parent=59 // pred_region
          %s2822 = sand.u32 %s141, 1
          %s2823 = scalar_lea.sflag [#allocation4], %s2822
          %s2824 = sand.u32 %s141, 1
          %s2825 = smul.addr %s2824, 2
          %s2826 = scalar_lea.vmem [#allocation8], %s2825
          %2827 = dma.done %s2823, 32
        $region64: #{tpu_custom_call.1} parent=59 // pred_fallthru
          _
        // Predicated region
        $region65: #{tpu_custom_call.1} parent=59 // pred_check
          %p2828 = pneg %p184
        $region66: #{tpu_custom_call.1} parent=59 // pred_check_branch
          %2830 = sbr.rel (%p2828) target = $region68
        $region67: #{tpu_custom_call.1} parent=59 // pred_region
          %s2831 = sand.u32 %s169, 1
          %s2832 = scalar_lea.sflag [#allocation10], %s2831
          %s2833 = sand.u32 %s169, 1
          %s2834 = smul.addr %s2833, 2
          %s2835 = scalar_lea.vmem [#allocation9], %s2834
          %2836 = dma.done %s2832, 32
        $region68: #{tpu_custom_call.1} parent=59 // pred_fallthru
          _
      $region60: #{tpu_custom_call.1} parent=5 // pred_fallthru
        _
    $region6: #{tpu_custom_call.1} parent=1 // loop_footer
      %s26 = sadd.s32 1, %s22
    $region7: #{tpu_custom_call.1} parent=1 // loop_footer_branch
      %21 = sbr.rel target = $region3
    $region8: #{tpu_custom_call.1} parent=1 // loop_exit
      _
    %2837 = vsyncpa [#allocation3], 1
    %s2838 = scalar_lea.sflag [#allocation3], 1
    %2839 = vsyncpa %s2838, 1
    %2840 = vsyncpa [#allocation6], 1
    %2841 = vsyncpa [#allocation4], 1
    %s2842 = scalar_lea.sflag [#allocation4], 1
    %2843 = vsyncpa %s2842, 1
    %2844 = vsyncpa [#allocation10], 1
    %s2845 = scalar_lea.sflag [#allocation10], 1
    %2846 = vsyncpa %s2845, 1

</llo_original>
